<compile_context>
chip_gen: v7x
topology: tpu7x:2x2x1
jax: 0.10.0
libtpu: 0.0.40
codegen_flags: <defaults>
</compile_context>

<pallas_src>
import functools
import math

import jax
import jax.numpy as jnp
from jax.experimental import pallas as pl
from jax.experimental.pallas import tpu as pltpu


# ----------------------------------------------------------------------------
# Pallas kernels: tiled matmul with fused BN (+residual) (+ReLU) epilogue
# ----------------------------------------------------------------------------
def _mm_bn_kernel(a_ref, b_ref, s_ref, c_ref, o_ref, acc_ref, *, relu):
    k = pl.program_id(2)

    @pl.when(k == 0)
    def _():
        acc_ref[...] = jnp.zeros_like(acc_ref)

    acc_ref[...] += jnp.dot(a_ref[...], b_ref[...],
                            preferred_element_type=jnp.float32)

    @pl.when(k == pl.num_programs(2) - 1)
    def _():
        y = acc_ref[...] * s_ref[...] + c_ref[...]
        if relu:
            y = jnp.maximum(y, 0.0)
        o_ref[...] = y.astype(o_ref.dtype)


def _mm_bn_res_kernel(a_ref, b_ref, s_ref, c_ref, r_ref, o_ref, acc_ref, *, relu):
    k = pl.program_id(2)

    @pl.when(k == 0)
    def _():
        acc_ref[...] = jnp.zeros_like(acc_ref)

    acc_ref[...] += jnp.dot(a_ref[...], b_ref[...],
                            preferred_element_type=jnp.float32)

    @pl.when(k == pl.num_programs(2) - 1)
    def _():
        y = acc_ref[...] * s_ref[...] + c_ref[...] + r_ref[...]
        if relu:
            y = jnp.maximum(y, 0.0)
        o_ref[...] = y.astype(o_ref.dtype)


def _round_up(x, m):
    return (x + m - 1) // m * m


def _fused_matmul_bn(a, w, scale, bias, residual=None, relu=True,
                     tm=128, tn=128, tk=128):
    """y = act( (a @ w) * scale + bias [+ residual] ), tiled on the MXU.

    a: (M, K) f32, w: (K, N) f32, scale/bias: (N,) f32,
    residual: optional (M, N) f32. Returns (M, N) f32.
    Operands are cast to bf16; accumulation is f32.
    """
    m, k = a.shape
    k2, n = w.shape
    assert k == k2
    mp, np_, kp = _round_up(m, tm), _round_up(n, tn), _round_up(k, tk)

    a_p = jnp.pad(a.astype(jnp.bfloat16), ((0, mp - m), (0, kp - k)))
    w_p = jnp.pad(w.astype(jnp.bfloat16), ((0, kp - k), (0, np_ - n)))
    s_p = jnp.pad(scale.reshape(1, n).astype(jnp.float32), ((0, 0), (0, np_ - n)))
    c_p = jnp.pad(bias.reshape(1, n).astype(jnp.float32), ((0, 0), (0, np_ - n)))

    in_specs = [
        pl.BlockSpec((tm, tk), lambda i, j, kk: (i, kk)),
        pl.BlockSpec((tk, tn), lambda i, j, kk: (kk, j)),
        pl.BlockSpec((1, tn), lambda i, j, kk: (0, j)),
        pl.BlockSpec((1, tn), lambda i, j, kk: (0, j)),
    ]
    args = [a_p, w_p, s_p, c_p]
    if residual is not None:
        r_p = jnp.pad(residual.astype(jnp.float32), ((0, mp - m), (0, np_ - n)))
        in_specs.append(pl.BlockSpec((tm, tn), lambda i, j, kk: (i, j)))
        args.append(r_p)
        kernel = functools.partial(_mm_bn_res_kernel, relu=relu)
    else:
        kernel = functools.partial(_mm_bn_kernel, relu=relu)

    out = pl.pallas_call(
        kernel,
        out_shape=jax.ShapeDtypeStruct((mp, np_), jnp.float32),
        grid=(mp // tm, np_ // tn, kp // tk),
        in_specs=in_specs,
        out_specs=pl.BlockSpec((tm, tn), lambda i, j, kk: (i, j)),
        scratch_shapes=[pltpu.VMEM((tm, tn), jnp.float32)],
        compiler_params=pltpu.CompilerParams(
            dimension_semantics=("parallel", "parallel", "arbitrary")),
    )(*args)
    return out[:m, :n]


# ----------------------------------------------------------------------------
# Conv + BN (+residual) (+ReLU) building block (im2col glue + fused kernel)
# ----------------------------------------------------------------------------
def _im2col(x, kh, kw, stride, pad):
    b, h, w, c = x.shape
    if pad > 0:
        x = jnp.pad(x, ((0, 0), (pad, pad), (pad, pad), (0, 0)))
    hp, wp = h + 2 * pad, w + 2 * pad
    ho = (hp - kh) // stride + 1
    wo = (wp - kw) // stride + 1
    cols = []
    for i in range(kh):
        for j in range(kw):
            cols.append(x[:, i: i + stride * (ho - 1) + 1: stride,
                             j: j + stride * (wo - 1) + 1: stride, :])
    patches = jnp.concatenate(cols, axis=-1)          # (B, Ho, Wo, kh*kw*C)
    return patches.reshape(b * ho * wo, kh * kw * c), ho, wo


def _bn_scale_bias(bn, eps=1e-5):
    scale = bn["gamma"] * jax.lax.rsqrt(bn["var"] + eps)
    bias = bn["beta"] - bn["mean"] * scale
    return scale, bias


def conv_bn(x, w, bn, stride, pad, relu, residual=None):
    # x: (B, H, W, Cin) NHWC ;  w: (Cout, Cin, kh, kw) (PyTorch layout)
    cout, cin, kh, kw = w.shape
    b = x.shape[0]
    a, ho, wo = _im2col(x, kh, kw, stride, pad)
    wm = jnp.transpose(w, (2, 3, 1, 0)).reshape(kh * kw * cin, cout)
    scale, bias = _bn_scale_bias(bn)
    res2d = None if residual is None else residual.reshape(b * ho * wo, cout)
    y = _fused_matmul_bn(a, wm, scale, bias, residual=res2d, relu=relu)
    return y.reshape(b, ho, wo, cout)


# ----------------------------------------------------------------------------
# ResBlock forward (public entry takes/returns NCHW like PyTorch)
# ----------------------------------------------------------------------------
@functools.partial(jax.jit, static_argnames=("stride",))
def res_block_forward(params, x_nchw, *, stride):
    x = jnp.transpose(x_nchw, (0, 2, 3, 1)).astype(jnp.float32)     # NHWC

    # main branch conv1 -> BN1 -> ReLU (fused epilogue)
    h = conv_bn(x, params["conv1_w"], params["bn1"], stride, 1, relu=True)

    # shortcut branch
    if "ds_w" in params:
        identity = conv_bn(x, params["ds_w"], params["ds_bn"], stride, 0,
                           relu=False)
    else:
        identity = x

    # conv2 -> BN2 -> (+ identity) -> ReLU, all fused in the matmul epilogue
    out = conv_bn(h, params["conv2_w"], params["bn2"], 1, 1, relu=True,
                  residual=identity)
    return jnp.transpose(out, (0, 3, 1, 2))                          # NCHW


# ----------------------------------------------------------------------------
# Pure-JAX reference (same bf16 operand casting, f32 accumulation)
# ----------------------------------------------------------------------------
@functools.partial(jax.jit, static_argnames=("stride",))
def res_block_reference(params, x_nchw, *, stride):
    def conv(x, w, s, pad):
        return jax.lax.conv_general_dilated(
            x.astype(jnp.bfloat16), w.astype(jnp.bfloat16),
            window_strides=(s, s), padding=[(pad, pad), (pad, pad)],
            dimension_numbers=("NCHW", "OIHW", "NCHW"),
            preferred_element_type=jnp.float32)

    def bn(x, p):
        scale, bias = _bn_scale_bias(p)
        return x * scale[None, :, None, None] + bias[None, :, None, None]

    x = x_nchw.astype(jnp.float32)
    out = jax.nn.relu(bn(conv(x, params["conv1_w"], stride, 1), params["bn1"]))
    out = bn(conv(out, params["conv2_w"], 1, 1), params["bn2"])
    if "ds_w" in params:
        identity = bn(conv(x, params["ds_w"], stride, 0), params["ds_bn"])
    else:
        identity = x
    return jax.nn.relu(out + identity)


# ----------------------------------------------------------------------------
# Deterministic parameter construction
# ----------------------------------------------------------------------------
def make_params(key, cin, cout, stride):
    ks = jax.random.split(key, 6)

    def conv_w(k, co, ci, kh, kw):
        std = math.sqrt(2.0 / (co * kh * kw))   # kaiming_normal_, fan_out, relu
        return jax.random.normal(k, (co, ci, kh, kw), jnp.float32) * std

    def bn_p(k, c):
        k1, k2, k3, k4 = jax.random.split(k, 4)
        return {
            "gamma": 1.0 + 0.1 * jax.random.normal(k1, (c,), jnp.float32),
            "beta": 0.1 * jax.random.normal(k2, (c,), jnp.float32),
            "mean": 0.1 * jax.random.normal(k3, (c,), jnp.float32),
            "var": 1.0 + 0.1 * jax.random.uniform(k4, (c,), jnp.float32),
        }

    p = {
        "conv1_w": conv_w(ks[0], cout, cin, 3, 3),
        "bn1": bn_p(ks[1], cout),
        "conv2_w": conv_w(ks[2], cout, cout, 3, 3),
        "bn2": bn_p(ks[3], cout),
    }
    if stride != 1 or cin != cout:
        p["ds_w"] = conv_w(ks[4], cout, cin, 1, 1)
        p["ds_bn"] = bn_p(ks[5], cout)
    return p


# ----------------------------------------------------------------------------
if __name__ == "__main__":
    key = jax.random.PRNGKey(0)
    ka, kb, kx = jax.random.split(key, 3)

    # Block A: identity shortcut (stride=1, 32 -> 32)
    params_a = make_params(ka, 32, 32, 1)
    # Block B: projection shortcut (stride=2, 32 -> 64)
    params_b = make_params(kb, 32, 64, 2)

    x = jax.random.normal(kx, (2, 32, 16, 16), jnp.float32)

    ya = res_block_forward(params_a, x, stride=1)
    yb = res_block_forward(params_b, ya, stride=2)
    yb = jax.block_until_ready(yb)

    assert ya.shape == (2, 32, 16, 16)
    assert yb.shape == (2, 64, 8, 8)

    # correctness vs a precision-matched XLA reference (per block, same input)
    ra = res_block_reference(params_a, x, stride=1)
    rb = res_block_reference(params_b, ya, stride=2)
    assert bool(jnp.allclose(ya, ra, rtol=1e-2, atol=1e-2))
    assert bool(jnp.allclose(yb, rb, rtol=1e-2, atol=1e-2))

    print("KERNEL_OK")
</pallas_src>

<mosaic_0001>
module attributes {stable_mosaic.version = 11 : i64} {
  func.func @_mm_bn_kernel(%arg0: i32, %arg1: i32, %arg2: i32, %arg3: memref<128x128xbf16, #tpu.memory_space<vmem>>, %arg4: memref<128x128xbf16, #tpu.memory_space<vmem>>, %arg5: memref<1x128xf32, #tpu.memory_space<vmem>>, %arg6: memref<1x128xf32, #tpu.memory_space<vmem>>, %arg7: memref<128x128xf32, #tpu.memory_space<vmem>>, %arg8: memref<128x128xf32, #tpu.memory_space<vmem>>) attributes {dimension_semantics = [#tpu.dimension_semantics<parallel>, #tpu.dimension_semantics<parallel>, #tpu.dimension_semantics<arbitrary>], iteration_bounds = array<i64: 4, 1, 3>, scalar_prefetch = 0 : i64, scratch_operands = 1 : i64, tpu.core_type = #tpu.core_type<tc>, window_params = [{transform_indices = @transform_0, window_bounds = array<i64: 128, 128>}, {transform_indices = @transform_1, window_bounds = array<i64: 128, 128>}, {transform_indices = @transform_2, window_bounds = array<i64: 1, 128>}, {transform_indices = @transform_3, window_bounds = array<i64: 1, 128>}, {transform_indices = @transform_4, window_bounds = array<i64: 128, 128>}]} {
    %c0_i32 = arith.constant 0 : i32
    %0 = arith.cmpi eq, %arg2, %c0_i32 : i32
    %1 = arith.extui %0 : i1 to i32
    %c0_i32_0 = arith.constant 0 : i32
    %2 = arith.cmpi ne, %1, %c0_i32_0 : i32
    scf.if %2 {
      %cst_9 = arith.constant 0.000000e+00 : f32
      %12 = vector.broadcast %cst_9 : f32 to vector<128x128xf32>
      %c0_10 = arith.constant 0 : index
      %c0_11 = arith.constant 0 : index
      %13 = vector.load %arg8[%c0_10, %c0_11] : memref<128x128xf32, #tpu.memory_space<vmem>>, vector<128x128xf32>
      tpu.vector_store %arg8[%c0_10, %c0_11], %12 {strides = array<i32>} : memref<128x128xf32, #tpu.memory_space<vmem>>, vector<128x128xf32>,
    } else {
    }
    %c0 = arith.constant 0 : index
    %c0_1 = arith.constant 0 : index
    %3 = vector.load %arg8[%c0, %c0_1] : memref<128x128xf32, #tpu.memory_space<vmem>>, vector<128x128xf32>
    %c0_2 = arith.constant 0 : index
    %c0_3 = arith.constant 0 : index
    %4 = vector.load %arg3[%c0_2, %c0_3] : memref<128x128xbf16, #tpu.memory_space<vmem>>, vector<128x128xbf16>
    %c0_4 = arith.constant 0 : index
    %c0_5 = arith.constant 0 : index
    %5 = vector.load %arg4[%c0_4, %c0_5] : memref<128x128xbf16, #tpu.memory_space<vmem>>, vector<128x128xbf16>
    %cst = arith.constant dense<0.000000e+00> : vector<128x128xf32>
    %6 = tpu.matmul %4, %5, %cst {dimension_numbers = #tpu.dot_dimension_numbers<[1], [0], [0], [1], [0, 0, 1, 1], [], []>} : vector<128x128xbf16>, vector<128x128xbf16>, vector<128x128xf32> -> vector<128x128xf32>
    %7 = arith.addf %3, %6 : vector<128x128xf32>
    %c0_6 = arith.constant 0 : index
    %c0_7 = arith.constant 0 : index
    %8 = vector.load %arg8[%c0_6, %c0_7] : memref<128x128xf32, #tpu.memory_space<vmem>>, vector<128x128xf32>
    tpu.vector_store %arg8[%c0_6, %c0_7], %7 {strides = array<i32>} : memref<128x128xf32, #tpu.memory_space<vmem>>, vector<128x128xf32>,
    %c2_i32 = arith.constant 2 : i32
    %9 = arith.cmpi eq, %arg2, %c2_i32 : i32
    %10 = arith.extui %9 : i1 to i32
    %c0_i32_8 = arith.constant 0 : i32
    %11 = arith.cmpi ne, %10, %c0_i32_8 : i32
    scf.if %11 {
      %c0_9 = arith.constant 0 : index
      %c0_10 = arith.constant 0 : index
      %12 = vector.load %arg8[%c0_9, %c0_10] : memref<128x128xf32, #tpu.memory_space<vmem>>, vector<128x128xf32>
      %c0_11 = arith.constant 0 : index
      %c0_12 = arith.constant 0 : index
      %13 = vector.load %arg5[%c0_11, %c0_12] : memref<1x128xf32, #tpu.memory_space<vmem>>, vector<1x128xf32>
      %14 = vector.broadcast %13 : vector<1x128xf32> to vector<128x128xf32>
      %15 = arith.mulf %12, %14 : vector<128x128xf32>
      %c0_13 = arith.constant 0 : index
      %c0_14 = arith.constant 0 : index
      %16 = vector.load %arg6[%c0_13, %c0_14] : memref<1x128xf32, #tpu.memory_space<vmem>>, vector<1x128xf32>
      %17 = vector.broadcast %16 : vector<1x128xf32> to vector<128x128xf32>
      %18 = arith.addf %15, %17 : vector<128x128xf32>
      %cst_15 = arith.constant 0.000000e+00 : f32
      %19 = vector.broadcast %cst_15 : f32 to vector<128x128xf32>
      %20 = arith.maximumf %18, %19 : vector<128x128xf32>
      %c0_16 = arith.constant 0 : index
      %c0_17 = arith.constant 0 : index
      %21 = vector.load %arg7[%c0_16, %c0_17] : memref<128x128xf32, #tpu.memory_space<vmem>>, vector<128x128xf32>
      tpu.vector_store %arg7[%c0_16, %c0_17], %20 {strides = array<i32>} : memref<128x128xf32, #tpu.memory_space<vmem>>, vector<128x128xf32>,
    } else {
    }
    return
  }
  func.func @transform_0(%arg0: i32, %arg1: i32, %arg2: i32) -> (i32, i32) {
    %c0_i32 = arith.constant 0 : i32
    return %arg0, %arg2 : i32, i32
  }
  func.func @transform_1(%arg0: i32, %arg1: i32, %arg2: i32) -> (i32, i32) {
    %c0_i32 = arith.constant 0 : i32
    return %arg2, %arg1 : i32, i32
  }
  func.func @transform_2(%arg0: i32, %arg1: i32, %arg2: i32) -> (i32, i32) {
    %c0_i32 = arith.constant 0 : i32
    %c0_i32_0 = arith.constant 0 : i32
    return %c0_i32, %arg1 : i32, i32
  }
  func.func @transform_3(%arg0: i32, %arg1: i32, %arg2: i32) -> (i32, i32) {
    %c0_i32 = arith.constant 0 : i32
    %c0_i32_0 = arith.constant 0 : i32
    return %c0_i32, %arg1 : i32, i32
  }
  func.func @transform_4(%arg0: i32, %arg1: i32, %arg2: i32) -> (i32, i32) {
    %c0_i32 = arith.constant 0 : i32
    return %arg0, %arg1 : i32, i32
  }
}

module attributes {stable_mosaic.version = 11 : i64} {
  func.func @_mm_bn_res_kernel(%arg0: i32, %arg1: i32, %arg2: i32, %arg3: memref<128x128xbf16, #tpu.memory_space<vmem>>, %arg4: memref<128x128xbf16, #tpu.memory_space<vmem>>, %arg5: memref<1x128xf32, #tpu.memory_space<vmem>>, %arg6: memref<1x128xf32, #tpu.memory_space<vmem>>, %arg7: memref<128x128xf32, #tpu.memory_space<vmem>>, %arg8: memref<128x128xf32, #tpu.memory_space<vmem>>, %arg9: memref<128x128xf32, #tpu.memory_space<vmem>>) attributes {dimension_semantics = [#tpu.dimension_semantics<parallel>, #tpu.dimension_semantics<parallel>, #tpu.dimension_semantics<arbitrary>], iteration_bounds = array<i64: 4, 1, 3>, scalar_prefetch = 0 : i64, scratch_operands = 1 : i64, tpu.core_type = #tpu.core_type<tc>, window_params = [{transform_indices = @transform_0, window_bounds = array<i64: 128, 128>}, {transform_indices = @transform_1, window_bounds = array<i64: 128, 128>}, {transform_indices = @transform_2, window_bounds = array<i64: 1, 128>}, {transform_indices = @transform_3, window_bounds = array<i64: 1, 128>}, {transform_indices = @transform_4, window_bounds = array<i64: 128, 128>}, {transform_indices = @transform_5, window_bounds = array<i64: 128, 128>}]} {
    %c0_i32 = arith.constant 0 : i32
    %0 = arith.cmpi eq, %arg2, %c0_i32 : i32
    %1 = arith.extui %0 : i1 to i32
    %c0_i32_0 = arith.constant 0 : i32
    %2 = arith.cmpi ne, %1, %c0_i32_0 : i32
    scf.if %2 {
      %cst_9 = arith.constant 0.000000e+00 : f32
      %12 = vector.broadcast %cst_9 : f32 to vector<128x128xf32>
      %c0_10 = arith.constant 0 : index
      %c0_11 = arith.constant 0 : index
      %13 = vector.load %arg9[%c0_10, %c0_11] : memref<128x128xf32, #tpu.memory_space<vmem>>, vector<128x128xf32>
      tpu.vector_store %arg9[%c0_10, %c0_11], %12 {strides = array<i32>} : memref<128x128xf32, #tpu.memory_space<vmem>>, vector<128x128xf32>,
    } else {
    }
    %c0 = arith.constant 0 : index
    %c0_1 = arith.constant 0 : index
    %3 = vector.load %arg9[%c0, %c0_1] : memref<128x128xf32, #tpu.memory_space<vmem>>, vector<128x128xf32>
    %c0_2 = arith.constant 0 : index
    %c0_3 = arith.constant 0 : index
    %4 = vector.load %arg3[%c0_2, %c0_3] : memref<128x128xbf16, #tpu.memory_space<vmem>>, vector<128x128xbf16>
    %c0_4 = arith.constant 0 : index
    %c0_5 = arith.constant 0 : index
    %5 = vector.load %arg4[%c0_4, %c0_5] : memref<128x128xbf16, #tpu.memory_space<vmem>>, vector<128x128xbf16>
    %cst = arith.constant dense<0.000000e+00> : vector<128x128xf32>
    %6 = tpu.matmul %4, %5, %cst {dimension_numbers = #tpu.dot_dimension_numbers<[1], [0], [0], [1], [0, 0, 1, 1], [], []>} : vector<128x128xbf16>, vector<128x128xbf16>, vector<128x128xf32> -> vector<128x128xf32>
    %7 = arith.addf %3, %6 : vector<128x128xf32>
    %c0_6 = arith.constant 0 : index
    %c0_7 = arith.constant 0 : index
    %8 = vector.load %arg9[%c0_6, %c0_7] : memref<128x128xf32, #tpu.memory_space<vmem>>, vector<128x128xf32>
    tpu.vector_store %arg9[%c0_6, %c0_7], %7 {strides = array<i32>} : memref<128x128xf32, #tpu.memory_space<vmem>>, vector<128x128xf32>,
    %c2_i32 = arith.constant 2 : i32
    %9 = arith.cmpi eq, %arg2, %c2_i32 : i32
    %10 = arith.extui %9 : i1 to i32
    %c0_i32_8 = arith.constant 0 : i32
    %11 = arith.cmpi ne, %10, %c0_i32_8 : i32
    scf.if %11 {
      %c0_9 = arith.constant 0 : index
      %c0_10 = arith.constant 0 : index
      %12 = vector.load %arg9[%c0_9, %c0_10] : memref<128x128xf32, #tpu.memory_space<vmem>>, vector<128x128xf32>
      %c0_11 = arith.constant 0 : index
      %c0_12 = arith.constant 0 : index
      %13 = vector.load %arg5[%c0_11, %c0_12] : memref<1x128xf32, #tpu.memory_space<vmem>>, vector<1x128xf32>
      %14 = vector.broadcast %13 : vector<1x128xf32> to vector<128x128xf32>
      %15 = arith.mulf %12, %14 : vector<128x128xf32>
      %c0_13 = arith.constant 0 : index
      %c0_14 = arith.constant 0 : index
      %16 = vector.load %arg6[%c0_13, %c0_14] : memref<1x128xf32, #tpu.memory_space<vmem>>, vector<1x128xf32>
      %17 = vector.broadcast %16 : vector<1x128xf32> to vector<128x128xf32>
      %18 = arith.addf %15, %17 : vector<128x128xf32>
      %c0_15 = arith.constant 0 : index
      %c0_16 = arith.constant 0 : index
      %19 = vector.load %arg7[%c0_15, %c0_16] : memref<128x128xf32, #tpu.memory_space<vmem>>, vector<128x128xf32>
      %20 = arith.addf %18, %19 : vector<128x128xf32>
      %cst_17 = arith.constant 0.000000e+00 : f32
      %21 = vector.broadcast %cst_17 : f32 to vector<128x128xf32>
      %22 = arith.maximumf %20, %21 : vector<128x128xf32>
      %c0_18 = arith.constant 0 : index
      %c0_19 = arith.constant 0 : index
      %23 = vector.load %arg8[%c0_18, %c0_19] : memref<128x128xf32, #tpu.memory_space<vmem>>, vector<128x128xf32>
      tpu.vector_store %arg8[%c0_18, %c0_19], %22 {strides = array<i32>} : memref<128x128xf32, #tpu.memory_space<vmem>>, vector<128x128xf32>,
    } else {
    }
    return
  }
  func.func @transform_0(%arg0: i32, %arg1: i32, %arg2: i32) -> (i32, i32) {
    %c0_i32 = arith.constant 0 : i32
    return %arg0, %arg2 : i32, i32
  }
  func.func @transform_1(%arg0: i32, %arg1: i32, %arg2: i32) -> (i32, i32) {
    %c0_i32 = arith.constant 0 : i32
    return %arg2, %arg1 : i32, i32
  }
  func.func @transform_2(%arg0: i32, %arg1: i32, %arg2: i32) -> (i32, i32) {
    %c0_i32 = arith.constant 0 : i32
    %c0_i32_0 = arith.constant 0 : i32
    return %c0_i32, %arg1 : i32, i32
  }
  func.func @transform_3(%arg0: i32, %arg1: i32, %arg2: i32) -> (i32, i32) {
    %c0_i32 = arith.constant 0 : i32
    %c0_i32_0 = arith.constant 0 : i32
    return %c0_i32, %arg1 : i32, i32
  }
  func.func @transform_4(%arg0: i32, %arg1: i32, %arg2: i32) -> (i32, i32) {
    %c0_i32 = arith.constant 0 : i32
    return %arg0, %arg1 : i32, i32
  }
  func.func @transform_5(%arg0: i32, %arg1: i32, %arg2: i32) -> (i32, i32) {
    %c0_i32 = arith.constant 0 : i32
    return %arg0, %arg1 : i32, i32
  }
}

</mosaic_0001>

<llo_original>
// kernel: res_block_forward.2
$region0: #{res_block_forward.2}
  #allocation0 [shape = 'u32[]', space=smem, size = 0x4, offset = 0x4, fixed_abs, tag = 'smem constant byte address 0x4 - core index']
  #allocation1 [shape = 'u32[144,128]{1,0:T(1,128)}', space=vmem, size = 0x12000, scoped, tag = 'internal scratch']
  #allocation2 [shape = 'f32[128,128]{1,0:T(8,128)}', space=vmem, size = 0x10000, scoped, tag = 'scratch operand']
  %s0 = inlined_call_operand.vmem [shape: bf16[512,384], index: 0, kind: input, shape index: {}]
  %s1 = inlined_call_operand.vmem [shape: bf16[384,128], index: 1, kind: input, shape index: {}]
  %s2 = inlined_call_operand.vmem [shape: f32[1,128], index: 2, kind: input, shape index: {}]
  %s3 = inlined_call_operand.vmem [shape: f32[1,128], index: 3, kind: input, shape index: {}]
  %s4 = inlined_call_operand.vmem [shape: f32[512,128], index: 4, kind: output, shape index: {}]
  %s5 = sld [smem:[#allocation0]]
  $region98: #{res_block_forward.2} parent=0
    _
  %s7 = ssub.s32 1, %s5
  %s8 = scalar_select 0, %s7, %s5
  $region1: #{res_block_forward.2} parent=0
    #allocation3 [shape = 'u8[65536]{0}', space=vmem, size = 0x10000, scoped, tag = 'input window, operand 0']
    loop: start=0, step=1, limit=14
    $region2: #{res_block_forward.2} parent=1 // loop_pre_header
      _
    $region3: #{res_block_forward.2} parent=1 // loop_header
      %s10 = sphi 0, %s14
      %p11 = scmp.ge.s32.totalorder %s10, 14
      %s17 = sphi 0, %s36
      %s18 = sphi 0, %s32
      %s19 = sphi 0, %s28
      %s20 = sphi 0, %s17
      %s21 = sphi 0, %s18
      %s22 = sphi 0, %s19
      %s23 = sphi 0, %s20
      %s24 = sphi 0, %s21
      %s25 = sphi 0, %s22
      %s41 = sphi 0, %s43
      %s44 = sphi 0, %s41
      %s45 = sphi 0, %s44
      %s61 = sphi 0, %s45
      %s69 = sphi 0, %s71
      %s72 = sphi 0, %s69
      %s73 = sphi 0, %s72
      %s89 = sphi 0, %s73
      %s95 = sphi 0, %s97
      %s98 = sphi 0, %s95
      %s99 = sphi 0, %s98
      %s115 = sphi 0, %s99
      %s121 = sphi 0, %s123
      %s124 = sphi 0, %s121
      %s125 = sphi 0, %s124
      %s141 = sphi 0, %s125
      %s149 = sphi 0, %s151
      %s152 = sphi 0, %s149
      %s153 = sphi 0, %s152
      %s169 = sphi 0, %s153
    $region4: #{res_block_forward.2} parent=1 // loop_header_branch
      %13 = sbr.rel (%p11) target = $region8
    $region5: #{res_block_forward.2} parent=1 // loop_body
      %s15 = ssub.s32 %s10, 1
      %s16 = ssub.s32 %s10, 2
      %s26 = sadd.s32 1, %s19
      %p27 = scmp.ge.s32.totalorder %s26, 3
      %s28 = scalar_select %p27, 0, %s26
      %s29 = sadd.s32 1, %s18
      %s30 = scalar_select %p27, %s29, %s18
      %p31 = scmp.ge.s32.totalorder %s30, 1
      %s32 = scalar_select %p31, 0, %s30
      %s33 = sadd.s32 1, %s17
      %s34 = scalar_select %p31, %s33, %s17
      %p35 = scmp.ge.s32.totalorder %s34, 4
      %s36 = scalar_select %p35, 0, %s34
      %s37 = ssub.s32 %s17, %s36
      %s38 = ssub.s32 %s19, %s28
      %s39 = sor.u32 %s37, %s38
      %p40 = scmp.eq.s32.totalorder %s39, 0
      %s42 = sadd.s32 %s41, 1
      %s43 = scalar_select %p40, %s41, %s42
      %p46 = pneg %p40
      %p47 = scmp.eq.s32.totalorder %s10, 11
      %p48 = por %p46, %p47
      %p49 = scmp.ne.s32.totalorder %s41, %s44
      %p50 = scmp.eq.s32.totalorder %s10, 0
      %p51 = por %p49, %p50
      %p52 = scmp.ne.s32.totalorder %s41, %s44
      %p53 = scmp.eq.s32.totalorder %s15, 11
      %p54 = por %p52, %p53
      %p55 = scmp.ne.s32.totalorder %s44, %s45
      %p56 = scmp.eq.s32.totalorder %s15, 0
      %p57 = por %p55, %p56
      %p58 = scmp.ne.s32.totalorder %s44, %s45
      %p59 = scmp.eq.s32.totalorder %s16, 11
      %p60 = por %p58, %p59
      %p62 = scmp.ne.s32.totalorder %s45, %s61
      %p63 = scmp.eq.s32.totalorder %s16, 0
      %p64 = por %p62, %p63
      %s65 = ssub.s32 %s19, %s28
      %s66 = ssub.s32 %s18, %s32
      %s67 = sor.u32 %s65, %s66
      %p68 = scmp.eq.s32.totalorder %s67, 0
      %s70 = sadd.s32 %s69, 1
      %s71 = scalar_select %p68, %s69, %s70
      %p74 = pneg %p68
      %p75 = scmp.eq.s32.totalorder %s10, 11
      %p76 = por %p74, %p75
      %p77 = scmp.ne.s32.totalorder %s69, %s72
      %p78 = scmp.eq.s32.totalorder %s10, 0
      %p79 = por %p77, %p78
      %p80 = scmp.ne.s32.totalorder %s69, %s72
      %p81 = scmp.eq.s32.totalorder %s15, 11
      %p82 = por %p80, %p81
      %p83 = scmp.ne.s32.totalorder %s72, %s73
      %p84 = scmp.eq.s32.totalorder %s15, 0
      %p85 = por %p83, %p84
      %p86 = scmp.ne.s32.totalorder %s72, %s73
      %p87 = scmp.eq.s32.totalorder %s16, 11
      %p88 = por %p86, %p87
      %p90 = scmp.ne.s32.totalorder %s73, %s89
      %p91 = scmp.eq.s32.totalorder %s16, 0
      %p92 = por %p90, %p91
      %s93 = ssub.s32 %s18, %s32
      %p94 = scmp.eq.s32.totalorder %s93, 0
      %s96 = sadd.s32 %s95, 1
      %s97 = scalar_select %p94, %s95, %s96
      %p100 = pneg %p94
      %p101 = scmp.eq.s32.totalorder %s10, 11
      %p102 = por %p100, %p101
      %p103 = scmp.ne.s32.totalorder %s95, %s98
      %p104 = scmp.eq.s32.totalorder %s10, 0
      %p105 = por %p103, %p104
      %p106 = scmp.ne.s32.totalorder %s95, %s98
      %p107 = scmp.eq.s32.totalorder %s15, 11
      %p108 = por %p106, %p107
      %p109 = scmp.ne.s32.totalorder %s98, %s99
      %p110 = scmp.eq.s32.totalorder %s15, 0
      %p111 = por %p109, %p110
      %p112 = scmp.ne.s32.totalorder %s98, %s99
      %p113 = scmp.eq.s32.totalorder %s16, 11
      %p114 = por %p112, %p113
      %p116 = scmp.ne.s32.totalorder %s99, %s115
      %p117 = scmp.eq.s32.totalorder %s16, 0
      %p118 = por %p116, %p117
      %s119 = ssub.s32 %s18, %s32
      %p120 = scmp.eq.s32.totalorder %s119, 0
      %s122 = sadd.s32 %s121, 1
      %s123 = scalar_select %p120, %s121, %s122
      %p126 = pneg %p120
      %p127 = scmp.eq.s32.totalorder %s10, 11
      %p128 = por %p126, %p127
      %p129 = scmp.ne.s32.totalorder %s121, %s124
      %p130 = scmp.eq.s32.totalorder %s10, 0
      %p131 = por %p129, %p130
      %p132 = scmp.ne.s32.totalorder %s121, %s124
      %p133 = scmp.eq.s32.totalorder %s15, 11
      %p134 = por %p132, %p133
      %p135 = scmp.ne.s32.totalorder %s124, %s125
      %p136 = scmp.eq.s32.totalorder %s15, 0
      %p137 = por %p135, %p136
      %p138 = scmp.ne.s32.totalorder %s124, %s125
      %p139 = scmp.eq.s32.totalorder %s16, 11
      %p140 = por %p138, %p139
      %p142 = scmp.ne.s32.totalorder %s125, %s141
      %p143 = scmp.eq.s32.totalorder %s16, 0
      %p144 = por %p142, %p143
      %s145 = ssub.s32 %s17, %s36
      %s146 = ssub.s32 %s18, %s32
      %s147 = sor.u32 %s145, %s146
      %p148 = scmp.eq.s32.totalorder %s147, 0
      %s150 = sadd.s32 %s149, 1
      %s151 = scalar_select %p148, %s149, %s150
      %p154 = pneg %p148
      %p155 = scmp.eq.s32.totalorder %s10, 11
      %p156 = por %p154, %p155
      %p157 = scmp.ne.s32.totalorder %s149, %s152
      %p158 = scmp.eq.s32.totalorder %s10, 0
      %p159 = por %p157, %p158
      %p160 = scmp.ne.s32.totalorder %s149, %s152
      %p161 = scmp.eq.s32.totalorder %s15, 11
      %p162 = por %p160, %p161
      %p163 = scmp.ne.s32.totalorder %s152, %s153
      %p164 = scmp.eq.s32.totalorder %s15, 0
      %p165 = por %p163, %p164
      %p166 = scmp.ne.s32.totalorder %s152, %s153
      %p167 = scmp.eq.s32.totalorder %s16, 11
      %p168 = por %p166, %p167
      %p170 = scmp.ne.s32.totalorder %s153, %s169
      %p171 = scmp.eq.s32.totalorder %s16, 0
      %p172 = por %p170, %p171
      %p173 = scmp.le.s32.totalorder 1, %s10
      %p174 = scmp.lt.s32.totalorder %s10, 13
      %p175 = pnand %p173, %p174
      %p176 = pneg %p175
      // Predicated region
      $region9: #{res_block_forward.2} parent=5 // pred_check
        _
      $region10: #{res_block_forward.2} parent=5 // pred_check_branch
        %178 = sbr.rel (%p175) target = $region12
      $region11: #{res_block_forward.2} parent=5 // pred_region
        %s179 = ssub.s32 %s10, 1
        // Predicated region
        $region13: #{res_block_forward.2} parent=11 // pred_check
          %p180 = pneg %p111
        $region14: #{res_block_forward.2} parent=11 // pred_check_branch
          %182 = sbr.rel (%p180) target = $region16
        $region15: #{res_block_forward.2} parent=11 // pred_region
          %p183 = scmp.lt.s32.totalorder %s21, 0
          %s184 = scalar_select %p183, %s21, 0
          %s185 = scalar_lea.vmem %s2, %s184
        $region16: #{res_block_forward.2} parent=11 // pred_fallthru
          _
        // Predicated region
        $region17: #{res_block_forward.2} parent=11 // pred_check
          %p186 = pneg %p137
        $region18: #{res_block_forward.2} parent=11 // pred_check_branch
          %188 = sbr.rel (%p186) target = $region20
        $region19: #{res_block_forward.2} parent=11 // pred_region
          %p189 = scmp.lt.s32.totalorder %s21, 0
          %s190 = scalar_select %p189, %s21, 0
          %s191 = scalar_lea.vmem %s3, %s190
        $region20: #{res_block_forward.2} parent=11 // pred_fallthru
          _
      $region12: #{res_block_forward.2} parent=5 // pred_fallthru
        _
      %p192 = scmp.lt.s32.totalorder %s10, 12
      // Predicated region
      $region21: #{res_block_forward.2} parent=5 // pred_check
        %p193 = pneg %p192
      $region22: #{res_block_forward.2} parent=5 // pred_check_branch
        %195 = sbr.rel (%p193) target = $region24
      $region23: #{res_block_forward.2} parent=5 // pred_region
        // Predicated region
        $region25: #{res_block_forward.2} parent=23 // pred_check
          %p196 = pneg %p51
        $region26: #{res_block_forward.2} parent=23 // pred_check_branch
          %198 = sbr.rel (%p196) target = $region28
        $region27: #{res_block_forward.2} parent=23 // pred_region
          %s199 = sand.u32 %s41, 1
          %s200 = sand.u32 %s41, 1
          %s201 = smul.addr %s200, 64
          %s202 = scalar_lea.vmem [#allocation3], %s201
          %s203 = smul.u32 16, %s17
          %s204 = smul.addr %s203, 3
          %s205 = sadd.s32 %s19, %s204
          %s206 = smul.addr %s205, 4
          %s207 = scalar_lea.vmem %s0, %s206
          // Predicated region
          $region29: #{res_block_forward.2} parent=27 // pred_check
            _
          $region30: #{res_block_forward.2} parent=27 // pred_check_branch
            %209 = sbr.rel (0) target = $region32
          $region31: #{res_block_forward.2} parent=27 // pred_region
            // Predicated region
            $region33: #{res_block_forward.2} parent=31 // pred_check
              _
            $region34: #{res_block_forward.2} parent=31 // pred_check_branch
              %211 = sbr.rel target = $region36
            $region35: #{res_block_forward.2} parent=31 // pred_region
              // Predicated region
              $region48: #{res_block_forward.2} parent=35 // pred_check
                _
              $region49: #{res_block_forward.2} parent=35 // pred_check_branch
                %256 = sbr.rel (0) target = $region51
              $region50: #{res_block_forward.2} parent=35 // pred_region
                loop: start=0, step=1, limit=1
                $region52: #{res_block_forward.2} parent=50 // loop_pre_header
                  _
                $region53: #{res_block_forward.2} parent=50 // loop_header
                  %s258 = sphi 0, %s262
                  %p259 = scmp.ge.s32.totalorder %s258, 1
                  %s263 = sphi %s207, %s207
                  %s264 = sphi %s202, %s202
                $region54: #{res_block_forward.2} parent=50 // loop_header_branch
                  %261 = sbr.rel (%p259) target = $region58
                $region55: #{res_block_forward.2} parent=50 // loop_body
                  _
                $region56: #{res_block_forward.2} parent=50 // loop_footer
                  %s262 = sadd.s32 1, %s258
                $region57: #{res_block_forward.2} parent=50 // loop_footer_branch
                  %257 = sbr.rel target = $region53
                $region58: #{res_block_forward.2} parent=50 // loop_exit
                  _
                loop: start=0, step=1, limit=1
                $region59: #{res_block_forward.2} parent=50 // loop_pre_header
                  _
                $region60: #{res_block_forward.2} parent=50 // loop_header
                  %s267 = sphi 0, %s271
                  %p268 = scmp.ge.s32.totalorder %s267, 1
                  %s272 = sphi %s207, %s207
                  %s273 = sphi %s202, %s202
                $region61: #{res_block_forward.2} parent=50 // loop_header_branch
                  %270 = sbr.rel (%p268) target = $region65
                $region62: #{res_block_forward.2} parent=50 // loop_body
                  %v274 = vld [vmem:[%s272] sm:$0xf]
                  %275 = vst [vmem:[%s273] sm:$0xf] %v274
                  %v276 = vld [vmem:[%s272 + $0xc] sm:$0xf]
                  %277 = vst [vmem:[%s273 + $0x4] sm:$0xf] %v276
                  %v278 = vld [vmem:[%s272 + $0x18] sm:$0xf]
                  %279 = vst [vmem:[%s273 + $0x8] sm:$0xf] %v278
                  %v280 = vld [vmem:[%s272 + $0x24] sm:$0xf]
                  %281 = vst [vmem:[%s273 + $0xc] sm:$0xf] %v280
                  %v282 = vld [vmem:[%s272 + $0x30] sm:$0xf]
                  %283 = vst [vmem:[%s273 + $0x10] sm:$0xf] %v282
                  %v284 = vld [vmem:[%s272 + $0x3c] sm:$0xf]
                  %285 = vst [vmem:[%s273 + $0x14] sm:$0xf] %v284
                  %v286 = vld [vmem:[%s272 + $0x48] sm:$0xf]
                  %287 = vst [vmem:[%s273 + $0x18] sm:$0xf] %v286
                  %v288 = vld [vmem:[%s272 + $0x54] sm:$0xf]
                  %289 = vst [vmem:[%s273 + $0x1c] sm:$0xf] %v288
                  %v290 = vld [vmem:[%s272 + $0x60] sm:$0xf]
                  %291 = vst [vmem:[%s273 + $0x20] sm:$0xf] %v290
                  %v292 = vld [vmem:[%s272 + $0x6c] sm:$0xf]
                  %293 = vst [vmem:[%s273 + $0x24] sm:$0xf] %v292
                  %v294 = vld [vmem:[%s272 + $0x78] sm:$0xf]
                  %295 = vst [vmem:[%s273 + $0x28] sm:$0xf] %v294
                  %v296 = vld [vmem:[%s272 + $0x84] sm:$0xf]
                  %297 = vst [vmem:[%s273 + $0x2c] sm:$0xf] %v296
                  %v298 = vld [vmem:[%s272 + $0x90] sm:$0xf]
                  %299 = vst [vmem:[%s273 + $0x30] sm:$0xf] %v298
                  %v300 = vld [vmem:[%s272 + $0x9c] sm:$0xf]
                  %301 = vst [vmem:[%s273 + $0x34] sm:$0xf] %v300
                  %v302 = vld [vmem:[%s272 + $0xa8] sm:$0xf]
                  %303 = vst [vmem:[%s273 + $0x38] sm:$0xf] %v302
                  %v304 = vld [vmem:[%s272 + $0xb4] sm:$0xf]
                  %305 = vst [vmem:[%s273 + $0x3c] sm:$0xf] %v304
                $region63: #{res_block_forward.2} parent=50 // loop_footer
                  %s271 = sadd.s32 1, %s267
                $region64: #{res_block_forward.2} parent=50 // loop_footer_branch
                  %266 = sbr.rel target = $region60
                $region65: #{res_block_forward.2} parent=50 // loop_exit
                  _
              $region51: #{res_block_forward.2} parent=35 // pred_fallthru
                _
            $region36: #{res_block_forward.2} parent=31 // pred_fallthru
              _
            // Predicated region
            $region37: #{res_block_forward.2} parent=31 // pred_check
              _
            $region38: #{res_block_forward.2} parent=31 // pred_check_branch
              %213 = sbr.rel (0) target = $region40
            $region39: #{res_block_forward.2} parent=31 // pred_region
              loop: start=0, step=1, limit=1
              $region41: #{res_block_forward.2} parent=39 // loop_pre_header
                _
              $region42: #{res_block_forward.2} parent=39 // loop_header
                %s216 = sphi 0, %s220
                %p217 = scmp.ge.s32.totalorder %s216, 1
                %s221 = sphi %s207, %s207
                %s222 = sphi %s202, %s202
              $region43: #{res_block_forward.2} parent=39 // loop_header_branch
                %219 = sbr.rel (%p217) target = $region47
              $region44: #{res_block_forward.2} parent=39 // loop_body
                %v223 = vld [vmem:[%s221] sm:$0xf]
                %224 = vst [vmem:[%s222] sm:$0xf] %v223
                %v225 = vld [vmem:[%s221 + $0xc] sm:$0xf]
                %226 = vst [vmem:[%s222 + $0x4] sm:$0xf] %v225
                %v227 = vld [vmem:[%s221 + $0x18] sm:$0xf]
                %228 = vst [vmem:[%s222 + $0x8] sm:$0xf] %v227
                %v229 = vld [vmem:[%s221 + $0x24] sm:$0xf]
                %230 = vst [vmem:[%s222 + $0xc] sm:$0xf] %v229
                %v231 = vld [vmem:[%s221 + $0x30] sm:$0xf]
                %232 = vst [vmem:[%s222 + $0x10] sm:$0xf] %v231
                %v233 = vld [vmem:[%s221 + $0x3c] sm:$0xf]
                %234 = vst [vmem:[%s222 + $0x14] sm:$0xf] %v233
                %v235 = vld [vmem:[%s221 + $0x48] sm:$0xf]
                %236 = vst [vmem:[%s222 + $0x18] sm:$0xf] %v235
                %v237 = vld [vmem:[%s221 + $0x54] sm:$0xf]
                %238 = vst [vmem:[%s222 + $0x1c] sm:$0xf] %v237
                %v239 = vld [vmem:[%s221 + $0x60] sm:$0xf]
                %240 = vst [vmem:[%s222 + $0x20] sm:$0xf] %v239
                %v241 = vld [vmem:[%s221 + $0x6c] sm:$0xf]
                %242 = vst [vmem:[%s222 + $0x24] sm:$0xf] %v241
                %v243 = vld [vmem:[%s221 + $0x78] sm:$0xf]
                %244 = vst [vmem:[%s222 + $0x28] sm:$0xf] %v243
                %v245 = vld [vmem:[%s221 + $0x84] sm:$0xf]
                %246 = vst [vmem:[%s222 + $0x2c] sm:$0xf] %v245
                %v247 = vld [vmem:[%s221 + $0x90] sm:$0xf]
                %248 = vst [vmem:[%s222 + $0x30] sm:$0xf] %v247
                %v249 = vld [vmem:[%s221 + $0x9c] sm:$0xf]
                %250 = vst [vmem:[%s222 + $0x34] sm:$0xf] %v249
                %v251 = vld [vmem:[%s221 + $0xa8] sm:$0xf]
                %252 = vst [vmem:[%s222 + $0x38] sm:$0xf] %v251
                %v253 = vld [vmem:[%s221 + $0xb4] sm:$0xf]
                %254 = vst [vmem:[%s222 + $0x3c] sm:$0xf] %v253
              $region45: #{res_block_forward.2} parent=39 // loop_footer
                %s220 = sadd.s32 1, %s216
              $region46: #{res_block_forward.2} parent=39 // loop_footer_branch
                %215 = sbr.rel target = $region42
              $region47: #{res_block_forward.2} parent=39 // loop_exit
                _
            $region40: #{res_block_forward.2} parent=31 // pred_fallthru
              _
          $region32: #{res_block_forward.2} parent=27 // pred_fallthru
            _
          %306 = vnop
        $region28: #{res_block_forward.2} parent=23 // pred_fallthru
          _
        // Predicated region
        $region66: #{res_block_forward.2} parent=23 // pred_check
          %p307 = pneg %p79
        $region67: #{res_block_forward.2} parent=23 // pred_check_branch
          %309 = sbr.rel (%p307) target = $region69
        $region68: #{res_block_forward.2} parent=23 // pred_region
          %s310 = smul.u32 16, %s19
          %p311 = scmp.lt.s32.totalorder %s310, 47
          %s312 = scalar_select %p311, %s310, 47
          %p313 = scmp.lt.s32.totalorder %s18, 0
          %s314 = scalar_select %p313, %s18, 0
          %s315 = sadd.s32 %s314, %s312
          %s316 = smul.addr %s315, 4
          %s317 = scalar_lea.vmem %s1, %s316
          %s318 = smul.u32 16, %s19
        $region69: #{res_block_forward.2} parent=23 // pred_fallthru
          _
      $region24: #{res_block_forward.2} parent=5 // pred_fallthru
        _
      %p319 = scmp.le.s32.totalorder 1, %s10
      %p320 = scmp.lt.s32.totalorder %s10, 13
      %p321 = pnand %p319, %p320
      %p322 = pneg %p321
      // Predicated region
      $region70: #{res_block_forward.2} parent=5 // pred_check
        _
      $region71: #{res_block_forward.2} parent=5 // pred_check_branch
        %324 = sbr.rel (%p321) target = $region73
      $region72: #{res_block_forward.2} parent=5 // pred_region
        %s325 = ssub.s32 %s10, 1
        %s326 = sand.u32 %s44, 1
        %s327 = sand.u32 %s44, 1
        %s328 = smul.addr %s327, 64
        %s329 = scalar_lea.vmem [#allocation3], %s328
        // Predicated region
        $region74: #{res_block_forward.2} parent=72 // pred_check
          %p330 = pneg %p57
        $region75: #{res_block_forward.2} parent=72 // pred_check_branch
          %332 = sbr.rel (%p330) target = $region77
        $region76: #{res_block_forward.2} parent=72 // pred_region
          _
        $region77: #{res_block_forward.2} parent=72 // pred_fallthru
          _
        %s333 = sand.u32 %s44, 1
        %s334 = sand.u32 %s44, 1
        %s335 = smul.addr %s334, 64
        %s336 = scalar_lea.vmem [#allocation3], %s335
        %p337 = pneg %p57
        %p338 = pneg %p54
        %s339 = smul.u32 16, %s22
        %p340 = scmp.lt.s32.totalorder %s339, 47
        %s341 = scalar_select %p340, %s339, 47
        %p342 = scmp.lt.s32.totalorder %s21, 0
        %s343 = scalar_select %p342, %s21, 0
        %s344 = sadd.s32 %s343, %s341
        %s345 = smul.addr %s344, 4
        %s346 = scalar_lea.vmem %s1, %s345
        %p347 = pneg %p85
        %p348 = pneg %p82
        %p349 = scmp.lt.s32.totalorder %s21, 0
        %s350 = scalar_select %p349, %s21, 0
        %s351 = scalar_lea.vmem %s2, %s350
        %p352 = pneg %p111
        %p353 = pneg %p108
        %p354 = scmp.lt.s32.totalorder %s21, 0
        %s355 = scalar_select %p354, %s21, 0
        %s356 = scalar_lea.vmem %s3, %s355
        %p357 = pneg %p137
        %p358 = pneg %p134
        %p359 = pneg %p165
        %p360 = pneg %p162
        %s361 = smul.u32 16, %s20
        %p362 = scmp.lt.s32.totalorder %s361, 63
        %s363 = scalar_select %p362, %s361, 63
        %p364 = scmp.lt.s32.totalorder %s21, 0
        %s365 = scalar_select %p364, %s21, 0
        %s366 = sadd.s32 %s365, %s363
        %s367 = smul.addr %s366, 8
        %s368 = scalar_lea.vmem %s4, %s367
        %s369 = smul.u32 16, %s20
        %s370 = smul.u32 16, %s22
        %p371 = scmp.lt.s32.totalorder %s370, 47
        %s372 = scalar_select %p371, %s370, 47
        %p373 = scmp.lt.s32.totalorder %s21, 0
        %s374 = scalar_select %p373, %s21, 0
        %s375 = sadd.s32 %s374, %s372
        %s376 = smul.addr %s375, 4
        %s377 = scalar_lea.vmem %s1, %s376
        %s378 = smul.u32 16, %s22
        %p379 = scmp.lt.s32.totalorder %s21, 0
        %s380 = scalar_select %p379, %s21, 0
        %s381 = scalar_lea.vmem %s2, %s380
        %p382 = scmp.lt.s32.totalorder %s21, 0
        %s383 = scalar_select %p382, %s21, 0
        %s384 = scalar_lea.vmem %s3, %s383
        %s385 = smul.u32 16, %s20
        %p386 = scmp.lt.s32.totalorder %s385, 63
        %s387 = scalar_select %p386, %s385, 63
        %p388 = scmp.lt.s32.totalorder %s21, 0
        %s389 = scalar_select %p388, %s21, 0
        %s390 = sadd.s32 %s389, %s387
        %s391 = smul.addr %s390, 8
        %s392 = scalar_lea.vmem %s4, %s391
        %s393 = smul.u32 16, %s20
        %p395 = scmp.eq.s32.totalorder %s22, 0
        // Predicated region
        $region78: #{res_block_forward.2} parent=72 // pred_check
          %p396 = pneg %p395
        $region79: #{res_block_forward.2} parent=72 // pred_check_branch
          %398 = sbr.rel (%p396) target = $region81
        $region80: #{res_block_forward.2} parent=72 // pred_region
          %399 = vst [vmem:[#allocation2] sm:$0xff] 0.0
          %400 = vst [vmem:[#allocation2 + $0x8] sm:$0xff] 0.0
          %401 = vst [vmem:[#allocation2 + $0x10] sm:$0xff] 0.0
          %402 = vst [vmem:[#allocation2 + $0x18] sm:$0xff] 0.0
          %403 = vst [vmem:[#allocation2 + $0x20] sm:$0xff] 0.0
          %404 = vst [vmem:[#allocation2 + $0x28] sm:$0xff] 0.0
          %405 = vst [vmem:[#allocation2 + $0x30] sm:$0xff] 0.0
          %406 = vst [vmem:[#allocation2 + $0x38] sm:$0xff] 0.0
          %407 = vst [vmem:[#allocation2 + $0x40] sm:$0xff] 0.0
          %408 = vst [vmem:[#allocation2 + $0x48] sm:$0xff] 0.0
          %409 = vst [vmem:[#allocation2 + $0x50] sm:$0xff] 0.0
          %410 = vst [vmem:[#allocation2 + $0x58] sm:$0xff] 0.0
          %411 = vst [vmem:[#allocation2 + $0x60] sm:$0xff] 0.0
          %412 = vst [vmem:[#allocation2 + $0x68] sm:$0xff] 0.0
          %413 = vst [vmem:[#allocation2 + $0x70] sm:$0xff] 0.0
          %414 = vst [vmem:[#allocation2 + $0x78] sm:$0xff] 0.0
        $region81: #{res_block_forward.2} parent=72 // pred_fallthru
          _
        %v415 = vld [vmem:[#allocation2] sm:$0xff]
        %v416 = vld [vmem:[#allocation2 + $0x8] sm:$0xff]
        %v417 = vld [vmem:[#allocation2 + $0x10] sm:$0xff]
        %v418 = vld [vmem:[#allocation2 + $0x18] sm:$0xff]
        %v419 = vld [vmem:[#allocation2 + $0x20] sm:$0xff]
        %v420 = vld [vmem:[#allocation2 + $0x28] sm:$0xff]
        %v421 = vld [vmem:[#allocation2 + $0x30] sm:$0xff]
        %v422 = vld [vmem:[#allocation2 + $0x38] sm:$0xff]
        %v423 = vld [vmem:[#allocation2 + $0x40] sm:$0xff]
        %v424 = vld [vmem:[#allocation2 + $0x48] sm:$0xff]
        %v425 = vld [vmem:[#allocation2 + $0x50] sm:$0xff]
        %v426 = vld [vmem:[#allocation2 + $0x58] sm:$0xff]
        %v427 = vld [vmem:[#allocation2 + $0x60] sm:$0xff]
        %v428 = vld [vmem:[#allocation2 + $0x68] sm:$0xff]
        %v429 = vld [vmem:[#allocation2 + $0x70] sm:$0xff]
        %v430 = vld [vmem:[#allocation2 + $0x78] sm:$0xff]
        %v431 = vld [vmem:[%s329] sm:$0xf]
        %v432 = vld [vmem:[%s329 + $0x4] sm:$0xf]
        %v433 = vld [vmem:[%s329 + $0x8] sm:$0xf]
        %v434 = vld [vmem:[%s329 + $0xc] sm:$0xf]
        %v435 = vld [vmem:[%s329 + $0x10] sm:$0xf]
        %v436 = vld [vmem:[%s329 + $0x14] sm:$0xf]
        %v437 = vld [vmem:[%s329 + $0x18] sm:$0xf]
        %v438 = vld [vmem:[%s329 + $0x1c] sm:$0xf]
        %v439 = vld [vmem:[%s329 + $0x20] sm:$0xf]
        %v440 = vld [vmem:[%s329 + $0x24] sm:$0xf]
        %v441 = vld [vmem:[%s329 + $0x28] sm:$0xf]
        %v442 = vld [vmem:[%s329 + $0x2c] sm:$0xf]
        %v443 = vld [vmem:[%s329 + $0x30] sm:$0xf]
        %v444 = vld [vmem:[%s329 + $0x34] sm:$0xf]
        %v445 = vld [vmem:[%s329 + $0x38] sm:$0xf]
        %v446 = vld [vmem:[%s329 + $0x3c] sm:$0xf]
        %v447 = vld [vmem:[%s377] sm:$0xf]
        %v448 = vld [vmem:[%s377 + $0x4] sm:$0xf]
        %v449 = vld [vmem:[%s377 + $0x8] sm:$0xf]
        %v450 = vld [vmem:[%s377 + $0xc] sm:$0xf]
        %v451 = vld [vmem:[%s377 + $0x10] sm:$0xf]
        %v452 = vld [vmem:[%s377 + $0x14] sm:$0xf]
        %v453 = vld [vmem:[%s377 + $0x18] sm:$0xf]
        %v454 = vld [vmem:[%s377 + $0x1c] sm:$0xf]
        %v455 = vld [vmem:[%s377 + $0x20] sm:$0xf]
        %v456 = vld [vmem:[%s377 + $0x24] sm:$0xf]
        %v457 = vld [vmem:[%s377 + $0x28] sm:$0xf]
        %v458 = vld [vmem:[%s377 + $0x2c] sm:$0xf]
        %v459 = vld [vmem:[%s377 + $0x30] sm:$0xf]
        %v460 = vld [vmem:[%s377 + $0x34] sm:$0xf]
        %v461 = vld [vmem:[%s377 + $0x38] sm:$0xf]
        %v462 = vld [vmem:[%s377 + $0x3c] sm:$0xf]
        %v479 = vunpack.c.l.b16 %v431
        %v480 = vunpack.c.l.b16 %v432
        %v481 = vunpack.c.l.b16 %v433
        %v482 = vunpack.c.l.b16 %v434
        %v483 = vunpack.c.l.b16 %v435
        %v484 = vunpack.c.l.b16 %v436
        %v485 = vunpack.c.l.b16 %v437
        %v486 = vunpack.c.l.b16 %v438
        %v487 = vunpack.c.l.b16 %v439
        %v488 = vunpack.c.l.b16 %v440
        %v489 = vunpack.c.l.b16 %v441
        %v490 = vunpack.c.l.b16 %v442
        %v491 = vunpack.c.l.b16 %v443
        %v492 = vunpack.c.l.b16 %v444
        %v493 = vunpack.c.l.b16 %v445
        %v494 = vunpack.c.l.b16 %v446
        %v495 = vpack.c.b16 %v480, %v479
        %v496 = vpack.c.b16 %v482, %v481
        %v497 = vpack.c.b16 %v484, %v483
        %v498 = vpack.c.b16 %v486, %v485
        %v499 = vpack.c.b16 %v488, %v487
        %v500 = vpack.c.b16 %v490, %v489
        %v501 = vpack.c.b16 %v492, %v491
        %v502 = vpack.c.b16 %v494, %v493
        %v527 = vunpack.c.l.b16 %v447
        %v528 = vunpack.c.l.b16 %v448
        %v529 = vunpack.c.l.b16 %v449
        %v530 = vunpack.c.l.b16 %v450
        %v531 = vunpack.c.l.b16 %v451
        %v532 = vunpack.c.l.b16 %v452
        %v533 = vunpack.c.l.b16 %v453
        %v534 = vunpack.c.l.b16 %v454
        %v535 = vunpack.c.l.b16 %v455
        %v536 = vunpack.c.l.b16 %v456
        %v537 = vunpack.c.l.b16 %v457
        %v538 = vunpack.c.l.b16 %v458
        %v539 = vunpack.c.l.b16 %v459
        %v540 = vunpack.c.l.b16 %v460
        %v541 = vunpack.c.l.b16 %v461
        %v542 = vunpack.c.l.b16 %v462
        %v543 = vpack.c.b16 %v528, %v527
        %v544 = vpack.c.b16 %v530, %v529
        %v545 = vpack.c.b16 %v532, %v531
        %v546 = vpack.c.b16 %v534, %v533
        %v547 = vpack.c.b16 %v536, %v535
        %v548 = vpack.c.b16 %v538, %v537
        %v549 = vpack.c.b16 %v540, %v539
        %v550 = vpack.c.b16 %v542, %v541
        %559 = vmatprep.subr.bf16.mxu0 0
        %560 = vmatpush1.bf16.msra.mxu0 %v543
        %561 = vmatprep.subr.bf16.mxu0 0
        %562 = vmatpush1.bf16.msra.mxu0 %v544
        %563 = vmatprep.subr.bf16.mxu0 0
        %564 = vmatpush1.bf16.msra.mxu0 %v545
        %565 = vmatprep.subr.bf16.mxu0 0
        %566 = vmatpush1.bf16.msra.mxu0 %v546
        %567 = vmatprep.subr.bf16.mxu0 0
        %568 = vmatpush1.bf16.msra.mxu0 %v547
        %569 = vmatprep.subr.bf16.mxu0 0
        %570 = vmatpush1.bf16.msra.mxu0 %v548
        %571 = vmatprep.subr.bf16.mxu0 0
        %572 = vmatpush1.bf16.msra.mxu0 %v549
        %573 = vmatprep.subr.bf16.mxu0 0
        %574 = vmatpush1.bf16.msra.mxu0 %v550
        %575 = vmatprep.subr.bf16.mxu0 0
        %576 = vmatpush1.bf16.msra.mxu0 0
        %577 = vmatprep.subr.bf16.mxu0 0
        %578 = vmatpush1.bf16.msra.mxu0 0
        %579 = vmatprep.subr.bf16.mxu0 0
        %580 = vmatpush1.bf16.msra.mxu0 0
        %581 = vmatprep.subr.bf16.mxu0 0
        %582 = vmatpush1.bf16.msra.mxu0 0
        %583 = vmatprep.subr.bf16.mxu0 0
        %584 = vmatpush1.bf16.msra.mxu0 0
        %585 = vmatprep.subr.bf16.mxu0 0
        %586 = vmatpush1.bf16.msra.mxu0 0
        %587 = vmatprep.subr.bf16.mxu0 0
        %588 = vmatpush1.bf16.msra.mxu0 0
        %589 = vmatprep.subr.bf16.mxu0 0
        %590 = vmatpush1.bf16.msra.mxu0 0
        %591 = vmatprep.mubr.bf16.mxu0 0
        %592 = vmatmul.mubr.bf16.gmra.mrb[0].mxu0 %v495
        %v593 = vpop.f32.mrb[0].mxu0
        %v594 = vadd.f32 0.0, %v593
        %v595 = vpop.f32.mrb[0].mxu0
        %v596 = vpop.f32.mrb[0].mxu0
        %v597 = vadd.f32 0.0, %v596
        %v598 = vpop.f32.mrb[0].mxu0
        %599 = vmatprep.mubr.bf16.mxu0 0
        %600 = vmatmul.mubr.bf16.gmra.mrb[0].mxu0 %v496
        %v601 = vpop.f32.mrb[0].mxu0
        %v602 = vadd.f32 0.0, %v601
        %v603 = vpop.f32.mrb[0].mxu0
        %v604 = vpop.f32.mrb[0].mxu0
        %v605 = vadd.f32 0.0, %v604
        %v606 = vpop.f32.mrb[0].mxu0
        %607 = vmatprep.mubr.bf16.mxu0 0
        %608 = vmatmul.mubr.bf16.gmra.mrb[0].mxu0 %v497
        %v609 = vpop.f32.mrb[0].mxu0
        %v610 = vadd.f32 0.0, %v609
        %v611 = vpop.f32.mrb[0].mxu0
        %v612 = vpop.f32.mrb[0].mxu0
        %v613 = vadd.f32 0.0, %v612
        %v614 = vpop.f32.mrb[0].mxu0
        %615 = vmatprep.mubr.bf16.mxu0 0
        %616 = vmatmul.mubr.bf16.gmra.mrb[0].mxu0 %v498
        %v617 = vpop.f32.mrb[0].mxu0
        %v618 = vadd.f32 0.0, %v617
        %v619 = vpop.f32.mrb[0].mxu0
        %v620 = vpop.f32.mrb[0].mxu0
        %v621 = vadd.f32 0.0, %v620
        %v622 = vpop.f32.mrb[0].mxu0
        %623 = vmatprep.mubr.bf16.mxu0 0
        %624 = vmatmul.mubr.bf16.gmra.mrb[0].mxu0 %v499
        %v625 = vpop.f32.mrb[0].mxu0
        %v626 = vadd.f32 0.0, %v625
        %v627 = vpop.f32.mrb[0].mxu0
        %v628 = vpop.f32.mrb[0].mxu0
        %v629 = vadd.f32 0.0, %v628
        %v630 = vpop.f32.mrb[0].mxu0
        %631 = vmatprep.mubr.bf16.mxu0 0
        %632 = vmatmul.mubr.bf16.gmra.mrb[0].mxu0 %v500
        %v633 = vpop.f32.mrb[0].mxu0
        %v634 = vadd.f32 0.0, %v633
        %v635 = vpop.f32.mrb[0].mxu0
        %v636 = vpop.f32.mrb[0].mxu0
        %v637 = vadd.f32 0.0, %v636
        %v638 = vpop.f32.mrb[0].mxu0
        %639 = vmatprep.mubr.bf16.mxu0 0
        %640 = vmatmul.mubr.bf16.gmra.mrb[0].mxu0 %v501
        %v641 = vpop.f32.mrb[0].mxu0
        %v642 = vadd.f32 0.0, %v641
        %v643 = vpop.f32.mrb[0].mxu0
        %v644 = vpop.f32.mrb[0].mxu0
        %v645 = vadd.f32 0.0, %v644
        %v646 = vpop.f32.mrb[0].mxu0
        %647 = vmatprep.mubr.bf16.mxu0 0
        %648 = vmatmul.mubr.bf16.gmra.mrb[0].mxu0 %v502
        %v649 = vpop.f32.mrb[0].mxu0
        %v650 = vadd.f32 0.0, %v649
        %v651 = vpop.f32.mrb[0].mxu0
        %v652 = vpop.f32.mrb[0].mxu0
        %v653 = vadd.f32 0.0, %v652
        %v654 = vpop.f32.mrb[0].mxu0
        %655 = vdwg.mxu0
        %v656 = vadd.f32 %v415, %v594
        %v657 = vadd.f32 %v416, %v597
        %v658 = vadd.f32 %v417, %v602
        %v659 = vadd.f32 %v418, %v605
        %v660 = vadd.f32 %v419, %v610
        %v661 = vadd.f32 %v420, %v613
        %v662 = vadd.f32 %v421, %v618
        %v663 = vadd.f32 %v422, %v621
        %v664 = vadd.f32 %v423, %v626
        %v665 = vadd.f32 %v424, %v629
        %v666 = vadd.f32 %v425, %v634
        %v667 = vadd.f32 %v426, %v637
        %v668 = vadd.f32 %v427, %v642
        %v669 = vadd.f32 %v428, %v645
        %v670 = vadd.f32 %v429, %v650
        %v671 = vadd.f32 %v430, %v653
        %672 = vst [vmem:[#allocation2] sm:$0xff] %v656
        %673 = vst [vmem:[#allocation2 + $0x8] sm:$0xff] %v657
        %674 = vst [vmem:[#allocation2 + $0x10] sm:$0xff] %v658
        %675 = vst [vmem:[#allocation2 + $0x18] sm:$0xff] %v659
        %676 = vst [vmem:[#allocation2 + $0x20] sm:$0xff] %v660
        %677 = vst [vmem:[#allocation2 + $0x28] sm:$0xff] %v661
        %678 = vst [vmem:[#allocation2 + $0x30] sm:$0xff] %v662
        %679 = vst [vmem:[#allocation2 + $0x38] sm:$0xff] %v663
        %680 = vst [vmem:[#allocation2 + $0x40] sm:$0xff] %v664
        %681 = vst [vmem:[#allocation2 + $0x48] sm:$0xff] %v665
        %682 = vst [vmem:[#allocation2 + $0x50] sm:$0xff] %v666
        %683 = vst [vmem:[#allocation2 + $0x58] sm:$0xff] %v667
        %684 = vst [vmem:[#allocation2 + $0x60] sm:$0xff] %v668
        %685 = vst [vmem:[#allocation2 + $0x68] sm:$0xff] %v669
        %686 = vst [vmem:[#allocation2 + $0x70] sm:$0xff] %v670
        %687 = vst [vmem:[#allocation2 + $0x78] sm:$0xff] %v671
        %p688 = scmp.eq.s32.totalorder %s22, 2
        // Predicated region
        $region82: #{res_block_forward.2} parent=72 // pred_check
          %p689 = pneg %p688
        $region83: #{res_block_forward.2} parent=72 // pred_check_branch
          %691 = sbr.rel (%p689) target = $region85
        $region84: #{res_block_forward.2} parent=72 // pred_region
          %v692 = vld [vmem:[#allocation2] sm:$0xff]
          %v693 = vld [vmem:[#allocation2 + $0x8] sm:$0xff]
          %v694 = vld [vmem:[#allocation2 + $0x10] sm:$0xff]
          %v695 = vld [vmem:[#allocation2 + $0x18] sm:$0xff]
          %v696 = vld [vmem:[#allocation2 + $0x20] sm:$0xff]
          %v697 = vld [vmem:[#allocation2 + $0x28] sm:$0xff]
          %v698 = vld [vmem:[#allocation2 + $0x30] sm:$0xff]
          %v699 = vld [vmem:[#allocation2 + $0x38] sm:$0xff]
          %v700 = vld [vmem:[#allocation2 + $0x40] sm:$0xff]
          %v701 = vld [vmem:[#allocation2 + $0x48] sm:$0xff]
          %v702 = vld [vmem:[#allocation2 + $0x50] sm:$0xff]
          %v703 = vld [vmem:[#allocation2 + $0x58] sm:$0xff]
          %v704 = vld [vmem:[#allocation2 + $0x60] sm:$0xff]
          %v705 = vld [vmem:[#allocation2 + $0x68] sm:$0xff]
          %v706 = vld [vmem:[#allocation2 + $0x70] sm:$0xff]
          %v707 = vld [vmem:[#allocation2 + $0x78] sm:$0xff]
          %v708 = vld [vmem:[%s381] sm:$0x1]
          %v710 = vlaneseq
          %v711 = vshrl.u32 %v710, 7
          %v712 = vsub.s32 0, %v711
          %v713 = vrot.slane %v708, %v712
          %v715 = vmul.f32 %v692, %v713
          %v716 = vmul.f32 %v693, %v713
          %v717 = vmul.f32 %v694, %v713
          %v718 = vmul.f32 %v695, %v713
          %v719 = vmul.f32 %v696, %v713
          %v720 = vmul.f32 %v697, %v713
          %v721 = vmul.f32 %v698, %v713
          %v722 = vmul.f32 %v699, %v713
          %v723 = vmul.f32 %v700, %v713
          %v724 = vmul.f32 %v701, %v713
          %v725 = vmul.f32 %v702, %v713
          %v726 = vmul.f32 %v703, %v713
          %v727 = vmul.f32 %v704, %v713
          %v728 = vmul.f32 %v705, %v713
          %v729 = vmul.f32 %v706, %v713
          %v730 = vmul.f32 %v707, %v713
          %v731 = vld [vmem:[%s384] sm:$0x1]
          %v733 = vlaneseq
          %v734 = vshrl.u32 %v733, 7
          %v735 = vsub.s32 0, %v734
          %v736 = vrot.slane %v731, %v735
          %v738 = vadd.f32 %v715, %v736
          %v739 = vadd.f32 %v716, %v736
          %v740 = vadd.f32 %v717, %v736
          %v741 = vadd.f32 %v718, %v736
          %v742 = vadd.f32 %v719, %v736
          %v743 = vadd.f32 %v720, %v736
          %v744 = vadd.f32 %v721, %v736
          %v745 = vadd.f32 %v722, %v736
          %v746 = vadd.f32 %v723, %v736
          %v747 = vadd.f32 %v724, %v736
          %v748 = vadd.f32 %v725, %v736
          %v749 = vadd.f32 %v726, %v736
          %v750 = vadd.f32 %v727, %v736
          %v751 = vadd.f32 %v728, %v736
          %v752 = vadd.f32 %v729, %v736
          %v753 = vadd.f32 %v730, %v736
          %v754 = vmax.f32 %v738, 0.0
          %v755 = vmax.f32 %v739, 0.0
          %v756 = vmax.f32 %v740, 0.0
          %v757 = vmax.f32 %v741, 0.0
          %v758 = vmax.f32 %v742, 0.0
          %v759 = vmax.f32 %v743, 0.0
          %v760 = vmax.f32 %v744, 0.0
          %v761 = vmax.f32 %v745, 0.0
          %v762 = vmax.f32 %v746, 0.0
          %v763 = vmax.f32 %v747, 0.0
          %v764 = vmax.f32 %v748, 0.0
          %v765 = vmax.f32 %v749, 0.0
          %v766 = vmax.f32 %v750, 0.0
          %v767 = vmax.f32 %v751, 0.0
          %v768 = vmax.f32 %v752, 0.0
          %v769 = vmax.f32 %v753, 0.0
          %770 = vst [vmem:[%s392] sm:$0xff] %v754
          %771 = vst [vmem:[%s392 + $0x8] sm:$0xff] %v755
          %772 = vst [vmem:[%s392 + $0x10] sm:$0xff] %v756
          %773 = vst [vmem:[%s392 + $0x18] sm:$0xff] %v757
          %774 = vst [vmem:[%s392 + $0x20] sm:$0xff] %v758
          %775 = vst [vmem:[%s392 + $0x28] sm:$0xff] %v759
          %776 = vst [vmem:[%s392 + $0x30] sm:$0xff] %v760
          %777 = vst [vmem:[%s392 + $0x38] sm:$0xff] %v761
          %778 = vst [vmem:[%s392 + $0x40] sm:$0xff] %v762
          %779 = vst [vmem:[%s392 + $0x48] sm:$0xff] %v763
          %780 = vst [vmem:[%s392 + $0x50] sm:$0xff] %v764
          %781 = vst [vmem:[%s392 + $0x58] sm:$0xff] %v765
          %782 = vst [vmem:[%s392 + $0x60] sm:$0xff] %v766
          %783 = vst [vmem:[%s392 + $0x68] sm:$0xff] %v767
          %784 = vst [vmem:[%s392 + $0x70] sm:$0xff] %v768
          %785 = vst [vmem:[%s392 + $0x78] sm:$0xff] %v769
        $region85: #{res_block_forward.2} parent=72 // pred_fallthru
          _
        %s786 = smul.u32 16, %s20
        %p787 = scmp.lt.s32.totalorder %s786, 63
        %s788 = scalar_select %p787, %s786, 63
        %p789 = scmp.lt.s32.totalorder %s21, 0
        %s790 = scalar_select %p789, %s21, 0
        %s791 = sadd.s32 %s790, %s788
        %s792 = smul.addr %s791, 8
        %s793 = scalar_lea.vmem %s4, %s792
        // Predicated region
        $region86: #{res_block_forward.2} parent=72 // pred_check
          %p794 = pneg %p162
        $region87: #{res_block_forward.2} parent=72 // pred_check_branch
          %796 = sbr.rel (%p794) target = $region89
        $region88: #{res_block_forward.2} parent=72 // pred_region
          %s797 = smul.u32 16, %s20
        $region89: #{res_block_forward.2} parent=72 // pred_fallthru
          _
      $region73: #{res_block_forward.2} parent=5 // pred_fallthru
        _
      %p798 = scmp.le.s32.totalorder 2, %s10
      // Predicated region
      $region90: #{res_block_forward.2} parent=5 // pred_check
        %p799 = pneg %p798
      $region91: #{res_block_forward.2} parent=5 // pred_check_branch
        %801 = sbr.rel (%p799) target = $region93
      $region92: #{res_block_forward.2} parent=5 // pred_region
        %s802 = ssub.s32 %s10, 2
        // Predicated region
        $region94: #{res_block_forward.2} parent=92 // pred_check
          %p803 = pneg %p168
        $region95: #{res_block_forward.2} parent=92 // pred_check_branch
          %805 = sbr.rel (%p803) target = $region97
        $region96: #{res_block_forward.2} parent=92 // pred_region
          %s806 = smul.u32 16, %s23
          %p807 = scmp.lt.s32.totalorder %s806, 63
          %s808 = scalar_select %p807, %s806, 63
          %p809 = scmp.lt.s32.totalorder %s24, 0
          %s810 = scalar_select %p809, %s24, 0
          %s811 = sadd.s32 %s810, %s808
          %s812 = smul.addr %s811, 8
          %s813 = scalar_lea.vmem %s4, %s812
        $region97: #{res_block_forward.2} parent=92 // pred_fallthru
          _
      $region93: #{res_block_forward.2} parent=5 // pred_fallthru
        _
    $region6: #{res_block_forward.2} parent=1 // loop_footer
      %s14 = sadd.s32 1, %s10
    $region7: #{res_block_forward.2} parent=1 // loop_footer_branch
      %9 = sbr.rel target = $region3
    $region8: #{res_block_forward.2} parent=1 // loop_exit
      _

// kernel: res_block_forward.3
$region0: #{res_block_forward.3}
  #allocation0 [shape = 'u32[]', space=smem, size = 0x4, offset = 0x4, fixed_abs, tag = 'smem constant byte address 0x4 - core index']
  #allocation1 [shape = 'u32[144,128]{1,0:T(1,128)}', space=vmem, size = 0x12000, scoped, tag = 'internal scratch']
  #allocation2 [shape = 'f32[128,128]{1,0:T(8,128)}', space=vmem, size = 0x10000, scoped, tag = 'scratch operand']
  %s0 = inlined_call_operand.vmem [shape: bf16[512,384], index: 0, kind: input, shape index: {}]
  %s1 = inlined_call_operand.vmem [shape: bf16[384,128], index: 1, kind: input, shape index: {}]
  %s2 = inlined_call_operand.vmem [shape: f32[1,128], index: 2, kind: input, shape index: {}]
  %s3 = inlined_call_operand.vmem [shape: f32[1,128], index: 3, kind: input, shape index: {}]
  %s4 = inlined_call_operand.vmem [shape: f32[512,128], index: 4, kind: input, shape index: {}]
  %s5 = inlined_call_operand.hbm [shape: f32[512,128], index: 5, kind: output, shape index: {}]
  %s6 = sld [smem:[#allocation0]]
  $region102: #{res_block_forward.3} parent=0
    _
  %s8 = ssub.s32 1, %s6
  %s9 = scalar_select 0, %s8, %s6
  $region1: #{res_block_forward.3} parent=0
    #allocation3 [shape = 'u8[65536]{0}', space=vmem, size = 0x10000, scoped, tag = 'input window, operand 0']
    #allocation4 [shape = 'u8[131072]{0}', space=vmem, size = 0x20000, scoped, tag = 'output window, operand 0']
    #allocation5 [shape = 's32[2]{0}', space=sflag, size = 0x8, scoped, tag = 'scoped memory for res_block_forward.3']
    %10 = vsyncpa [#allocation5], 0
    %s11 = scalar_lea.sflag [#allocation5], 1
    %12 = vsyncpa %s11, 0
    loop: start=0, step=1, limit=14
    $region2: #{res_block_forward.3} parent=1 // loop_pre_header
      _
    $region3: #{res_block_forward.3} parent=1 // loop_header
      %s14 = sphi 0, %s18
      %p15 = scmp.ge.s32.totalorder %s14, 14
      %s21 = sphi 0, %s40
      %s22 = sphi 0, %s36
      %s23 = sphi 0, %s32
      %s24 = sphi 0, %s21
      %s25 = sphi 0, %s22
      %s26 = sphi 0, %s23
      %s27 = sphi 0, %s24
      %s28 = sphi 0, %s25
      %s29 = sphi 0, %s26
      %s45 = sphi 0, %s47
      %s48 = sphi 0, %s45
      %s49 = sphi 0, %s48
      %s65 = sphi 0, %s49
      %s73 = sphi 0, %s75
      %s76 = sphi 0, %s73
      %s77 = sphi 0, %s76
      %s93 = sphi 0, %s77
      %s99 = sphi 0, %s101
      %s102 = sphi 0, %s99
      %s103 = sphi 0, %s102
      %s119 = sphi 0, %s103
      %s125 = sphi 0, %s127
      %s128 = sphi 0, %s125
      %s129 = sphi 0, %s128
      %s145 = sphi 0, %s129
      %s153 = sphi 0, %s155
      %s156 = sphi 0, %s153
      %s157 = sphi 0, %s156
      %s173 = sphi 0, %s157
      %s181 = sphi 0, %s183
      %s184 = sphi 0, %s181
      %s185 = sphi 0, %s184
      %s201 = sphi 0, %s185
    $region4: #{res_block_forward.3} parent=1 // loop_header_branch
      %17 = sbr.rel (%p15) target = $region8
    $region5: #{res_block_forward.3} parent=1 // loop_body
      %s19 = ssub.s32 %s14, 1
      %s20 = ssub.s32 %s14, 2
      %s30 = sadd.s32 1, %s23
      %p31 = scmp.ge.s32.totalorder %s30, 3
      %s32 = scalar_select %p31, 0, %s30
      %s33 = sadd.s32 1, %s22
      %s34 = scalar_select %p31, %s33, %s22
      %p35 = scmp.ge.s32.totalorder %s34, 1
      %s36 = scalar_select %p35, 0, %s34
      %s37 = sadd.s32 1, %s21
      %s38 = scalar_select %p35, %s37, %s21
      %p39 = scmp.ge.s32.totalorder %s38, 4
      %s40 = scalar_select %p39, 0, %s38
      %s41 = ssub.s32 %s21, %s40
      %s42 = ssub.s32 %s23, %s32
      %s43 = sor.u32 %s41, %s42
      %p44 = scmp.eq.s32.totalorder %s43, 0
      %s46 = sadd.s32 %s45, 1
      %s47 = scalar_select %p44, %s45, %s46
      %p50 = pneg %p44
      %p51 = scmp.eq.s32.totalorder %s14, 11
      %p52 = por %p50, %p51
      %p53 = scmp.ne.s32.totalorder %s45, %s48
      %p54 = scmp.eq.s32.totalorder %s14, 0
      %p55 = por %p53, %p54
      %p56 = scmp.ne.s32.totalorder %s45, %s48
      %p57 = scmp.eq.s32.totalorder %s19, 11
      %p58 = por %p56, %p57
      %p59 = scmp.ne.s32.totalorder %s48, %s49
      %p60 = scmp.eq.s32.totalorder %s19, 0
      %p61 = por %p59, %p60
      %p62 = scmp.ne.s32.totalorder %s48, %s49
      %p63 = scmp.eq.s32.totalorder %s20, 11
      %p64 = por %p62, %p63
      %p66 = scmp.ne.s32.totalorder %s49, %s65
      %p67 = scmp.eq.s32.totalorder %s20, 0
      %p68 = por %p66, %p67
      %s69 = ssub.s32 %s23, %s32
      %s70 = ssub.s32 %s22, %s36
      %s71 = sor.u32 %s69, %s70
      %p72 = scmp.eq.s32.totalorder %s71, 0
      %s74 = sadd.s32 %s73, 1
      %s75 = scalar_select %p72, %s73, %s74
      %p78 = pneg %p72
      %p79 = scmp.eq.s32.totalorder %s14, 11
      %p80 = por %p78, %p79
      %p81 = scmp.ne.s32.totalorder %s73, %s76
      %p82 = scmp.eq.s32.totalorder %s14, 0
      %p83 = por %p81, %p82
      %p84 = scmp.ne.s32.totalorder %s73, %s76
      %p85 = scmp.eq.s32.totalorder %s19, 11
      %p86 = por %p84, %p85
      %p87 = scmp.ne.s32.totalorder %s76, %s77
      %p88 = scmp.eq.s32.totalorder %s19, 0
      %p89 = por %p87, %p88
      %p90 = scmp.ne.s32.totalorder %s76, %s77
      %p91 = scmp.eq.s32.totalorder %s20, 11
      %p92 = por %p90, %p91
      %p94 = scmp.ne.s32.totalorder %s77, %s93
      %p95 = scmp.eq.s32.totalorder %s20, 0
      %p96 = por %p94, %p95
      %s97 = ssub.s32 %s22, %s36
      %p98 = scmp.eq.s32.totalorder %s97, 0
      %s100 = sadd.s32 %s99, 1
      %s101 = scalar_select %p98, %s99, %s100
      %p104 = pneg %p98
      %p105 = scmp.eq.s32.totalorder %s14, 11
      %p106 = por %p104, %p105
      %p107 = scmp.ne.s32.totalorder %s99, %s102
      %p108 = scmp.eq.s32.totalorder %s14, 0
      %p109 = por %p107, %p108
      %p110 = scmp.ne.s32.totalorder %s99, %s102
      %p111 = scmp.eq.s32.totalorder %s19, 11
      %p112 = por %p110, %p111
      %p113 = scmp.ne.s32.totalorder %s102, %s103
      %p114 = scmp.eq.s32.totalorder %s19, 0
      %p115 = por %p113, %p114
      %p116 = scmp.ne.s32.totalorder %s102, %s103
      %p117 = scmp.eq.s32.totalorder %s20, 11
      %p118 = por %p116, %p117
      %p120 = scmp.ne.s32.totalorder %s103, %s119
      %p121 = scmp.eq.s32.totalorder %s20, 0
      %p122 = por %p120, %p121
      %s123 = ssub.s32 %s22, %s36
      %p124 = scmp.eq.s32.totalorder %s123, 0
      %s126 = sadd.s32 %s125, 1
      %s127 = scalar_select %p124, %s125, %s126
      %p130 = pneg %p124
      %p131 = scmp.eq.s32.totalorder %s14, 11
      %p132 = por %p130, %p131
      %p133 = scmp.ne.s32.totalorder %s125, %s128
      %p134 = scmp.eq.s32.totalorder %s14, 0
      %p135 = por %p133, %p134
      %p136 = scmp.ne.s32.totalorder %s125, %s128
      %p137 = scmp.eq.s32.totalorder %s19, 11
      %p138 = por %p136, %p137
      %p139 = scmp.ne.s32.totalorder %s128, %s129
      %p140 = scmp.eq.s32.totalorder %s19, 0
      %p141 = por %p139, %p140
      %p142 = scmp.ne.s32.totalorder %s128, %s129
      %p143 = scmp.eq.s32.totalorder %s20, 11
      %p144 = por %p142, %p143
      %p146 = scmp.ne.s32.totalorder %s129, %s145
      %p147 = scmp.eq.s32.totalorder %s20, 0
      %p148 = por %p146, %p147
      %s149 = ssub.s32 %s21, %s40
      %s150 = ssub.s32 %s22, %s36
      %s151 = sor.u32 %s149, %s150
      %p152 = scmp.eq.s32.totalorder %s151, 0
      %s154 = sadd.s32 %s153, 1
      %s155 = scalar_select %p152, %s153, %s154
      %p158 = pneg %p152
      %p159 = scmp.eq.s32.totalorder %s14, 11
      %p160 = por %p158, %p159
      %p161 = scmp.ne.s32.totalorder %s153, %s156
      %p162 = scmp.eq.s32.totalorder %s14, 0
      %p163 = por %p161, %p162
      %p164 = scmp.ne.s32.totalorder %s153, %s156
      %p165 = scmp.eq.s32.totalorder %s19, 11
      %p166 = por %p164, %p165
      %p167 = scmp.ne.s32.totalorder %s156, %s157
      %p168 = scmp.eq.s32.totalorder %s19, 0
      %p169 = por %p167, %p168
      %p170 = scmp.ne.s32.totalorder %s156, %s157
      %p171 = scmp.eq.s32.totalorder %s20, 11
      %p172 = por %p170, %p171
      %p174 = scmp.ne.s32.totalorder %s157, %s173
      %p175 = scmp.eq.s32.totalorder %s20, 0
      %p176 = por %p174, %p175
      %s177 = ssub.s32 %s21, %s40
      %s178 = ssub.s32 %s22, %s36
      %s179 = sor.u32 %s177, %s178
      %p180 = scmp.eq.s32.totalorder %s179, 0
      %s182 = sadd.s32 %s181, 1
      %s183 = scalar_select %p180, %s181, %s182
      %p186 = pneg %p180
      %p187 = scmp.eq.s32.totalorder %s14, 11
      %p188 = por %p186, %p187
      %p189 = scmp.ne.s32.totalorder %s181, %s184
      %p190 = scmp.eq.s32.totalorder %s14, 0
      %p191 = por %p189, %p190
      %p192 = scmp.ne.s32.totalorder %s181, %s184
      %p193 = scmp.eq.s32.totalorder %s19, 11
      %p194 = por %p192, %p193
      %p195 = scmp.ne.s32.totalorder %s184, %s185
      %p196 = scmp.eq.s32.totalorder %s19, 0
      %p197 = por %p195, %p196
      %p198 = scmp.ne.s32.totalorder %s184, %s185
      %p199 = scmp.eq.s32.totalorder %s20, 11
      %p200 = por %p198, %p199
      %p202 = scmp.ne.s32.totalorder %s185, %s201
      %p203 = scmp.eq.s32.totalorder %s20, 0
      %p204 = por %p202, %p203
      %p205 = scmp.le.s32.totalorder 1, %s14
      %p206 = scmp.lt.s32.totalorder %s14, 13
      %p207 = pnand %p205, %p206
      %p208 = pneg %p207
      // Predicated region
      $region9: #{res_block_forward.3} parent=5 // pred_check
        _
      $region10: #{res_block_forward.3} parent=5 // pred_check_branch
        %210 = sbr.rel (%p207) target = $region12
      $region11: #{res_block_forward.3} parent=5 // pred_region
        %s211 = ssub.s32 %s14, 1
        // Predicated region
        $region13: #{res_block_forward.3} parent=11 // pred_check
          %p212 = pneg %p115
        $region14: #{res_block_forward.3} parent=11 // pred_check_branch
          %214 = sbr.rel (%p212) target = $region16
        $region15: #{res_block_forward.3} parent=11 // pred_region
          %p215 = scmp.lt.s32.totalorder %s25, 0
          %s216 = scalar_select %p215, %s25, 0
          %s217 = scalar_lea.vmem %s2, %s216
        $region16: #{res_block_forward.3} parent=11 // pred_fallthru
          _
        // Predicated region
        $region17: #{res_block_forward.3} parent=11 // pred_check
          %p218 = pneg %p141
        $region18: #{res_block_forward.3} parent=11 // pred_check_branch
          %220 = sbr.rel (%p218) target = $region20
        $region19: #{res_block_forward.3} parent=11 // pred_region
          %p221 = scmp.lt.s32.totalorder %s25, 0
          %s222 = scalar_select %p221, %s25, 0
          %s223 = scalar_lea.vmem %s3, %s222
        $region20: #{res_block_forward.3} parent=11 // pred_fallthru
          _
      $region12: #{res_block_forward.3} parent=5 // pred_fallthru
        _
      %p224 = scmp.lt.s32.totalorder %s14, 12
      // Predicated region
      $region21: #{res_block_forward.3} parent=5 // pred_check
        %p225 = pneg %p224
      $region22: #{res_block_forward.3} parent=5 // pred_check_branch
        %227 = sbr.rel (%p225) target = $region24
      $region23: #{res_block_forward.3} parent=5 // pred_region
        // Predicated region
        $region25: #{res_block_forward.3} parent=23 // pred_check
          %p228 = pneg %p55
        $region26: #{res_block_forward.3} parent=23 // pred_check_branch
          %230 = sbr.rel (%p228) target = $region28
        $region27: #{res_block_forward.3} parent=23 // pred_region
          %s231 = sand.u32 %s45, 1
          %s232 = sand.u32 %s45, 1
          %s233 = smul.addr %s232, 64
          %s234 = scalar_lea.vmem [#allocation3], %s233
          %s235 = smul.u32 16, %s21
          %s236 = smul.addr %s235, 3
          %s237 = sadd.s32 %s23, %s236
          %s238 = smul.addr %s237, 4
          %s239 = scalar_lea.vmem %s0, %s238
          // Predicated region
          $region29: #{res_block_forward.3} parent=27 // pred_check
            _
          $region30: #{res_block_forward.3} parent=27 // pred_check_branch
            %241 = sbr.rel (0) target = $region32
          $region31: #{res_block_forward.3} parent=27 // pred_region
            // Predicated region
            $region33: #{res_block_forward.3} parent=31 // pred_check
              _
            $region34: #{res_block_forward.3} parent=31 // pred_check_branch
              %243 = sbr.rel target = $region36
            $region35: #{res_block_forward.3} parent=31 // pred_region
              // Predicated region
              $region48: #{res_block_forward.3} parent=35 // pred_check
                _
              $region49: #{res_block_forward.3} parent=35 // pred_check_branch
                %288 = sbr.rel (0) target = $region51
              $region50: #{res_block_forward.3} parent=35 // pred_region
                loop: start=0, step=1, limit=1
                $region52: #{res_block_forward.3} parent=50 // loop_pre_header
                  _
                $region53: #{res_block_forward.3} parent=50 // loop_header
                  %s290 = sphi 0, %s294
                  %p291 = scmp.ge.s32.totalorder %s290, 1
                  %s295 = sphi %s239, %s239
                  %s296 = sphi %s234, %s234
                $region54: #{res_block_forward.3} parent=50 // loop_header_branch
                  %293 = sbr.rel (%p291) target = $region58
                $region55: #{res_block_forward.3} parent=50 // loop_body
                  _
                $region56: #{res_block_forward.3} parent=50 // loop_footer
                  %s294 = sadd.s32 1, %s290
                $region57: #{res_block_forward.3} parent=50 // loop_footer_branch
                  %289 = sbr.rel target = $region53
                $region58: #{res_block_forward.3} parent=50 // loop_exit
                  _
                loop: start=0, step=1, limit=1
                $region59: #{res_block_forward.3} parent=50 // loop_pre_header
                  _
                $region60: #{res_block_forward.3} parent=50 // loop_header
                  %s299 = sphi 0, %s303
                  %p300 = scmp.ge.s32.totalorder %s299, 1
                  %s304 = sphi %s239, %s239
                  %s305 = sphi %s234, %s234
                $region61: #{res_block_forward.3} parent=50 // loop_header_branch
                  %302 = sbr.rel (%p300) target = $region65
                $region62: #{res_block_forward.3} parent=50 // loop_body
                  %v306 = vld [vmem:[%s304] sm:$0xf]
                  %307 = vst [vmem:[%s305] sm:$0xf] %v306
                  %v308 = vld [vmem:[%s304 + $0xc] sm:$0xf]
                  %309 = vst [vmem:[%s305 + $0x4] sm:$0xf] %v308
                  %v310 = vld [vmem:[%s304 + $0x18] sm:$0xf]
                  %311 = vst [vmem:[%s305 + $0x8] sm:$0xf] %v310
                  %v312 = vld [vmem:[%s304 + $0x24] sm:$0xf]
                  %313 = vst [vmem:[%s305 + $0xc] sm:$0xf] %v312
                  %v314 = vld [vmem:[%s304 + $0x30] sm:$0xf]
                  %315 = vst [vmem:[%s305 + $0x10] sm:$0xf] %v314
                  %v316 = vld [vmem:[%s304 + $0x3c] sm:$0xf]
                  %317 = vst [vmem:[%s305 + $0x14] sm:$0xf] %v316
                  %v318 = vld [vmem:[%s304 + $0x48] sm:$0xf]
                  %319 = vst [vmem:[%s305 + $0x18] sm:$0xf] %v318
                  %v320 = vld [vmem:[%s304 + $0x54] sm:$0xf]
                  %321 = vst [vmem:[%s305 + $0x1c] sm:$0xf] %v320
                  %v322 = vld [vmem:[%s304 + $0x60] sm:$0xf]
                  %323 = vst [vmem:[%s305 + $0x20] sm:$0xf] %v322
                  %v324 = vld [vmem:[%s304 + $0x6c] sm:$0xf]
                  %325 = vst [vmem:[%s305 + $0x24] sm:$0xf] %v324
                  %v326 = vld [vmem:[%s304 + $0x78] sm:$0xf]
                  %327 = vst [vmem:[%s305 + $0x28] sm:$0xf] %v326
                  %v328 = vld [vmem:[%s304 + $0x84] sm:$0xf]
                  %329 = vst [vmem:[%s305 + $0x2c] sm:$0xf] %v328
                  %v330 = vld [vmem:[%s304 + $0x90] sm:$0xf]
                  %331 = vst [vmem:[%s305 + $0x30] sm:$0xf] %v330
                  %v332 = vld [vmem:[%s304 + $0x9c] sm:$0xf]
                  %333 = vst [vmem:[%s305 + $0x34] sm:$0xf] %v332
                  %v334 = vld [vmem:[%s304 + $0xa8] sm:$0xf]
                  %335 = vst [vmem:[%s305 + $0x38] sm:$0xf] %v334
                  %v336 = vld [vmem:[%s304 + $0xb4] sm:$0xf]
                  %337 = vst [vmem:[%s305 + $0x3c] sm:$0xf] %v336
                $region63: #{res_block_forward.3} parent=50 // loop_footer
                  %s303 = sadd.s32 1, %s299
                $region64: #{res_block_forward.3} parent=50 // loop_footer_branch
                  %298 = sbr.rel target = $region60
                $region65: #{res_block_forward.3} parent=50 // loop_exit
                  _
              $region51: #{res_block_forward.3} parent=35 // pred_fallthru
                _
            $region36: #{res_block_forward.3} parent=31 // pred_fallthru
              _
            // Predicated region
            $region37: #{res_block_forward.3} parent=31 // pred_check
              _
            $region38: #{res_block_forward.3} parent=31 // pred_check_branch
              %245 = sbr.rel (0) target = $region40
            $region39: #{res_block_forward.3} parent=31 // pred_region
              loop: start=0, step=1, limit=1
              $region41: #{res_block_forward.3} parent=39 // loop_pre_header
                _
              $region42: #{res_block_forward.3} parent=39 // loop_header
                %s248 = sphi 0, %s252
                %p249 = scmp.ge.s32.totalorder %s248, 1
                %s253 = sphi %s239, %s239
                %s254 = sphi %s234, %s234
              $region43: #{res_block_forward.3} parent=39 // loop_header_branch
                %251 = sbr.rel (%p249) target = $region47
              $region44: #{res_block_forward.3} parent=39 // loop_body
                %v255 = vld [vmem:[%s253] sm:$0xf]
                %256 = vst [vmem:[%s254] sm:$0xf] %v255
                %v257 = vld [vmem:[%s253 + $0xc] sm:$0xf]
                %258 = vst [vmem:[%s254 + $0x4] sm:$0xf] %v257
                %v259 = vld [vmem:[%s253 + $0x18] sm:$0xf]
                %260 = vst [vmem:[%s254 + $0x8] sm:$0xf] %v259
                %v261 = vld [vmem:[%s253 + $0x24] sm:$0xf]
                %262 = vst [vmem:[%s254 + $0xc] sm:$0xf] %v261
                %v263 = vld [vmem:[%s253 + $0x30] sm:$0xf]
                %264 = vst [vmem:[%s254 + $0x10] sm:$0xf] %v263
                %v265 = vld [vmem:[%s253 + $0x3c] sm:$0xf]
                %266 = vst [vmem:[%s254 + $0x14] sm:$0xf] %v265
                %v267 = vld [vmem:[%s253 + $0x48] sm:$0xf]
                %268 = vst [vmem:[%s254 + $0x18] sm:$0xf] %v267
                %v269 = vld [vmem:[%s253 + $0x54] sm:$0xf]
                %270 = vst [vmem:[%s254 + $0x1c] sm:$0xf] %v269
                %v271 = vld [vmem:[%s253 + $0x60] sm:$0xf]
                %272 = vst [vmem:[%s254 + $0x20] sm:$0xf] %v271
                %v273 = vld [vmem:[%s253 + $0x6c] sm:$0xf]
                %274 = vst [vmem:[%s254 + $0x24] sm:$0xf] %v273
                %v275 = vld [vmem:[%s253 + $0x78] sm:$0xf]
                %276 = vst [vmem:[%s254 + $0x28] sm:$0xf] %v275
                %v277 = vld [vmem:[%s253 + $0x84] sm:$0xf]
                %278 = vst [vmem:[%s254 + $0x2c] sm:$0xf] %v277
                %v279 = vld [vmem:[%s253 + $0x90] sm:$0xf]
                %280 = vst [vmem:[%s254 + $0x30] sm:$0xf] %v279
                %v281 = vld [vmem:[%s253 + $0x9c] sm:$0xf]
                %282 = vst [vmem:[%s254 + $0x34] sm:$0xf] %v281
                %v283 = vld [vmem:[%s253 + $0xa8] sm:$0xf]
                %284 = vst [vmem:[%s254 + $0x38] sm:$0xf] %v283
                %v285 = vld [vmem:[%s253 + $0xb4] sm:$0xf]
                %286 = vst [vmem:[%s254 + $0x3c] sm:$0xf] %v285
              $region45: #{res_block_forward.3} parent=39 // loop_footer
                %s252 = sadd.s32 1, %s248
              $region46: #{res_block_forward.3} parent=39 // loop_footer_branch
                %247 = sbr.rel target = $region42
              $region47: #{res_block_forward.3} parent=39 // loop_exit
                _
            $region40: #{res_block_forward.3} parent=31 // pred_fallthru
              _
          $region32: #{res_block_forward.3} parent=27 // pred_fallthru
            _
          %338 = vnop
        $region28: #{res_block_forward.3} parent=23 // pred_fallthru
          _
        // Predicated region
        $region66: #{res_block_forward.3} parent=23 // pred_check
          %p339 = pneg %p83
        $region67: #{res_block_forward.3} parent=23 // pred_check_branch
          %341 = sbr.rel (%p339) target = $region69
        $region68: #{res_block_forward.3} parent=23 // pred_region
          %s342 = smul.u32 16, %s23
          %p343 = scmp.lt.s32.totalorder %s342, 47
          %s344 = scalar_select %p343, %s342, 47
          %p345 = scmp.lt.s32.totalorder %s22, 0
          %s346 = scalar_select %p345, %s22, 0
          %s347 = sadd.s32 %s346, %s344
          %s348 = smul.addr %s347, 4
          %s349 = scalar_lea.vmem %s1, %s348
          %s350 = smul.u32 16, %s23
        $region69: #{res_block_forward.3} parent=23 // pred_fallthru
          _
        // Predicated region
        $region70: #{res_block_forward.3} parent=23 // pred_check
          %p351 = pneg %p163
        $region71: #{res_block_forward.3} parent=23 // pred_check_branch
          %353 = sbr.rel (%p351) target = $region73
        $region72: #{res_block_forward.3} parent=23 // pred_region
          %s354 = smul.u32 16, %s21
          %p355 = scmp.lt.s32.totalorder %s354, 63
          %s356 = scalar_select %p355, %s354, 63
          %p357 = scmp.lt.s32.totalorder %s22, 0
          %s358 = scalar_select %p357, %s22, 0
          %s359 = sadd.s32 %s358, %s356
          %s360 = smul.addr %s359, 8
          %s361 = scalar_lea.vmem %s4, %s360
          %s362 = smul.u32 16, %s21
        $region73: #{res_block_forward.3} parent=23 // pred_fallthru
          _
      $region24: #{res_block_forward.3} parent=5 // pred_fallthru
        _
      %p363 = scmp.le.s32.totalorder 1, %s14
      %p364 = scmp.lt.s32.totalorder %s14, 13
      %p365 = pnand %p363, %p364
      %p366 = pneg %p365
      // Predicated region
      $region74: #{res_block_forward.3} parent=5 // pred_check
        _
      $region75: #{res_block_forward.3} parent=5 // pred_check_branch
        %368 = sbr.rel (%p365) target = $region77
      $region76: #{res_block_forward.3} parent=5 // pred_region
        %s369 = ssub.s32 %s14, 1
        %s370 = sand.u32 %s48, 1
        %s371 = sand.u32 %s48, 1
        %s372 = smul.addr %s371, 64
        %s373 = scalar_lea.vmem [#allocation3], %s372
        // Predicated region
        $region78: #{res_block_forward.3} parent=76 // pred_check
          %p374 = pneg %p61
        $region79: #{res_block_forward.3} parent=76 // pred_check_branch
          %376 = sbr.rel (%p374) target = $region81
        $region80: #{res_block_forward.3} parent=76 // pred_region
          _
        $region81: #{res_block_forward.3} parent=76 // pred_fallthru
          _
        %s377 = sand.u32 %s48, 1
        %s378 = sand.u32 %s48, 1
        %s379 = smul.addr %s378, 64
        %s380 = scalar_lea.vmem [#allocation3], %s379
        %p381 = pneg %p61
        %p382 = pneg %p58
        %s383 = smul.u32 16, %s26
        %p384 = scmp.lt.s32.totalorder %s383, 47
        %s385 = scalar_select %p384, %s383, 47
        %p386 = scmp.lt.s32.totalorder %s25, 0
        %s387 = scalar_select %p386, %s25, 0
        %s388 = sadd.s32 %s387, %s385
        %s389 = smul.addr %s388, 4
        %s390 = scalar_lea.vmem %s1, %s389
        %p391 = pneg %p89
        %p392 = pneg %p86
        %p393 = scmp.lt.s32.totalorder %s25, 0
        %s394 = scalar_select %p393, %s25, 0
        %s395 = scalar_lea.vmem %s2, %s394
        %p396 = pneg %p115
        %p397 = pneg %p112
        %p398 = scmp.lt.s32.totalorder %s25, 0
        %s399 = scalar_select %p398, %s25, 0
        %s400 = scalar_lea.vmem %s3, %s399
        %p401 = pneg %p141
        %p402 = pneg %p138
        %s403 = smul.u32 16, %s24
        %p404 = scmp.lt.s32.totalorder %s403, 63
        %s405 = scalar_select %p404, %s403, 63
        %p406 = scmp.lt.s32.totalorder %s25, 0
        %s407 = scalar_select %p406, %s25, 0
        %s408 = sadd.s32 %s407, %s405
        %s409 = smul.addr %s408, 8
        %s410 = scalar_lea.vmem %s4, %s409
        %p411 = pneg %p169
        %p412 = pneg %p166
        %p413 = pneg %p197
        %p414 = pneg %p194
        %s415 = sand.u32 %s184, 1
        %s416 = scalar_lea.sflag [#allocation5], %s415
        %s417 = sand.u32 %s184, 1
        %s418 = smul.addr %s417, 128
        %s419 = scalar_lea.vmem [#allocation4], %s418
        %s420 = smul.u32 16, %s24
        %s421 = smul.u32 16, %s26
        %p422 = scmp.lt.s32.totalorder %s421, 47
        %s423 = scalar_select %p422, %s421, 47
        %p424 = scmp.lt.s32.totalorder %s25, 0
        %s425 = scalar_select %p424, %s25, 0
        %s426 = sadd.s32 %s425, %s423
        %s427 = smul.addr %s426, 4
        %s428 = scalar_lea.vmem %s1, %s427
        %s429 = smul.u32 16, %s26
        %p430 = scmp.lt.s32.totalorder %s25, 0
        %s431 = scalar_select %p430, %s25, 0
        %s432 = scalar_lea.vmem %s2, %s431
        %p433 = scmp.lt.s32.totalorder %s25, 0
        %s434 = scalar_select %p433, %s25, 0
        %s435 = scalar_lea.vmem %s3, %s434
        %s436 = smul.u32 16, %s24
        %p437 = scmp.lt.s32.totalorder %s436, 63
        %s438 = scalar_select %p437, %s436, 63
        %p439 = scmp.lt.s32.totalorder %s25, 0
        %s440 = scalar_select %p439, %s25, 0
        %s441 = sadd.s32 %s440, %s438
        %s442 = smul.addr %s441, 8
        %s443 = scalar_lea.vmem %s4, %s442
        %s444 = smul.u32 16, %s24
        %s445 = smul.u32 16, %s24
        %p447 = scmp.eq.s32.totalorder %s26, 0
        // Predicated region
        $region82: #{res_block_forward.3} parent=76 // pred_check
          %p448 = pneg %p447
        $region83: #{res_block_forward.3} parent=76 // pred_check_branch
          %450 = sbr.rel (%p448) target = $region85
        $region84: #{res_block_forward.3} parent=76 // pred_region
          %451 = vst [vmem:[#allocation2] sm:$0xff] 0.0
          %452 = vst [vmem:[#allocation2 + $0x8] sm:$0xff] 0.0
          %453 = vst [vmem:[#allocation2 + $0x10] sm:$0xff] 0.0
          %454 = vst [vmem:[#allocation2 + $0x18] sm:$0xff] 0.0
          %455 = vst [vmem:[#allocation2 + $0x20] sm:$0xff] 0.0
          %456 = vst [vmem:[#allocation2 + $0x28] sm:$0xff] 0.0
          %457 = vst [vmem:[#allocation2 + $0x30] sm:$0xff] 0.0
          %458 = vst [vmem:[#allocation2 + $0x38] sm:$0xff] 0.0
          %459 = vst [vmem:[#allocation2 + $0x40] sm:$0xff] 0.0
          %460 = vst [vmem:[#allocation2 + $0x48] sm:$0xff] 0.0
          %461 = vst [vmem:[#allocation2 + $0x50] sm:$0xff] 0.0
          %462 = vst [vmem:[#allocation2 + $0x58] sm:$0xff] 0.0
          %463 = vst [vmem:[#allocation2 + $0x60] sm:$0xff] 0.0
          %464 = vst [vmem:[#allocation2 + $0x68] sm:$0xff] 0.0
          %465 = vst [vmem:[#allocation2 + $0x70] sm:$0xff] 0.0
          %466 = vst [vmem:[#allocation2 + $0x78] sm:$0xff] 0.0
        $region85: #{res_block_forward.3} parent=76 // pred_fallthru
          _
        %v467 = vld [vmem:[#allocation2] sm:$0xff]
        %v468 = vld [vmem:[#allocation2 + $0x8] sm:$0xff]
        %v469 = vld [vmem:[#allocation2 + $0x10] sm:$0xff]
        %v470 = vld [vmem:[#allocation2 + $0x18] sm:$0xff]
        %v471 = vld [vmem:[#allocation2 + $0x20] sm:$0xff]
        %v472 = vld [vmem:[#allocation2 + $0x28] sm:$0xff]
        %v473 = vld [vmem:[#allocation2 + $0x30] sm:$0xff]
        %v474 = vld [vmem:[#allocation2 + $0x38] sm:$0xff]
        %v475 = vld [vmem:[#allocation2 + $0x40] sm:$0xff]
        %v476 = vld [vmem:[#allocation2 + $0x48] sm:$0xff]
        %v477 = vld [vmem:[#allocation2 + $0x50] sm:$0xff]
        %v478 = vld [vmem:[#allocation2 + $0x58] sm:$0xff]
        %v479 = vld [vmem:[#allocation2 + $0x60] sm:$0xff]
        %v480 = vld [vmem:[#allocation2 + $0x68] sm:$0xff]
        %v481 = vld [vmem:[#allocation2 + $0x70] sm:$0xff]
        %v482 = vld [vmem:[#allocation2 + $0x78] sm:$0xff]
        %v483 = vld [vmem:[%s373] sm:$0xf]
        %v484 = vld [vmem:[%s373 + $0x4] sm:$0xf]
        %v485 = vld [vmem:[%s373 + $0x8] sm:$0xf]
        %v486 = vld [vmem:[%s373 + $0xc] sm:$0xf]
        %v487 = vld [vmem:[%s373 + $0x10] sm:$0xf]
        %v488 = vld [vmem:[%s373 + $0x14] sm:$0xf]
        %v489 = vld [vmem:[%s373 + $0x18] sm:$0xf]
        %v490 = vld [vmem:[%s373 + $0x1c] sm:$0xf]
        %v491 = vld [vmem:[%s373 + $0x20] sm:$0xf]
        %v492 = vld [vmem:[%s373 + $0x24] sm:$0xf]
        %v493 = vld [vmem:[%s373 + $0x28] sm:$0xf]
        %v494 = vld [vmem:[%s373 + $0x2c] sm:$0xf]
        %v495 = vld [vmem:[%s373 + $0x30] sm:$0xf]
        %v496 = vld [vmem:[%s373 + $0x34] sm:$0xf]
        %v497 = vld [vmem:[%s373 + $0x38] sm:$0xf]
        %v498 = vld [vmem:[%s373 + $0x3c] sm:$0xf]
        %v499 = vld [vmem:[%s428] sm:$0xf]
        %v500 = vld [vmem:[%s428 + $0x4] sm:$0xf]
        %v501 = vld [vmem:[%s428 + $0x8] sm:$0xf]
        %v502 = vld [vmem:[%s428 + $0xc] sm:$0xf]
        %v503 = vld [vmem:[%s428 + $0x10] sm:$0xf]
        %v504 = vld [vmem:[%s428 + $0x14] sm:$0xf]
        %v505 = vld [vmem:[%s428 + $0x18] sm:$0xf]
        %v506 = vld [vmem:[%s428 + $0x1c] sm:$0xf]
        %v507 = vld [vmem:[%s428 + $0x20] sm:$0xf]
        %v508 = vld [vmem:[%s428 + $0x24] sm:$0xf]
        %v509 = vld [vmem:[%s428 + $0x28] sm:$0xf]
        %v510 = vld [vmem:[%s428 + $0x2c] sm:$0xf]
        %v511 = vld [vmem:[%s428 + $0x30] sm:$0xf]
        %v512 = vld [vmem:[%s428 + $0x34] sm:$0xf]
        %v513 = vld [vmem:[%s428 + $0x38] sm:$0xf]
        %v514 = vld [vmem:[%s428 + $0x3c] sm:$0xf]
        %v531 = vunpack.c.l.b16 %v483
        %v532 = vunpack.c.l.b16 %v484
        %v533 = vunpack.c.l.b16 %v485
        %v534 = vunpack.c.l.b16 %v486
        %v535 = vunpack.c.l.b16 %v487
        %v536 = vunpack.c.l.b16 %v488
        %v537 = vunpack.c.l.b16 %v489
        %v538 = vunpack.c.l.b16 %v490
        %v539 = vunpack.c.l.b16 %v491
        %v540 = vunpack.c.l.b16 %v492
        %v541 = vunpack.c.l.b16 %v493
        %v542 = vunpack.c.l.b16 %v494
        %v543 = vunpack.c.l.b16 %v495
        %v544 = vunpack.c.l.b16 %v496
        %v545 = vunpack.c.l.b16 %v497
        %v546 = vunpack.c.l.b16 %v498
        %v547 = vpack.c.b16 %v532, %v531
        %v548 = vpack.c.b16 %v534, %v533
        %v549 = vpack.c.b16 %v536, %v535
        %v550 = vpack.c.b16 %v538, %v537
        %v551 = vpack.c.b16 %v540, %v539
        %v552 = vpack.c.b16 %v542, %v541
        %v553 = vpack.c.b16 %v544, %v543
        %v554 = vpack.c.b16 %v546, %v545
        %v579 = vunpack.c.l.b16 %v499
        %v580 = vunpack.c.l.b16 %v500
        %v581 = vunpack.c.l.b16 %v501
        %v582 = vunpack.c.l.b16 %v502
        %v583 = vunpack.c.l.b16 %v503
        %v584 = vunpack.c.l.b16 %v504
        %v585 = vunpack.c.l.b16 %v505
        %v586 = vunpack.c.l.b16 %v506
        %v587 = vunpack.c.l.b16 %v507
        %v588 = vunpack.c.l.b16 %v508
        %v589 = vunpack.c.l.b16 %v509
        %v590 = vunpack.c.l.b16 %v510
        %v591 = vunpack.c.l.b16 %v511
        %v592 = vunpack.c.l.b16 %v512
        %v593 = vunpack.c.l.b16 %v513
        %v594 = vunpack.c.l.b16 %v514
        %v595 = vpack.c.b16 %v580, %v579
        %v596 = vpack.c.b16 %v582, %v581
        %v597 = vpack.c.b16 %v584, %v583
        %v598 = vpack.c.b16 %v586, %v585
        %v599 = vpack.c.b16 %v588, %v587
        %v600 = vpack.c.b16 %v590, %v589
        %v601 = vpack.c.b16 %v592, %v591
        %v602 = vpack.c.b16 %v594, %v593
        %611 = vmatprep.subr.bf16.mxu0 0
        %612 = vmatpush1.bf16.msra.mxu0 %v595
        %613 = vmatprep.subr.bf16.mxu0 0
        %614 = vmatpush1.bf16.msra.mxu0 %v596
        %615 = vmatprep.subr.bf16.mxu0 0
        %616 = vmatpush1.bf16.msra.mxu0 %v597
        %617 = vmatprep.subr.bf16.mxu0 0
        %618 = vmatpush1.bf16.msra.mxu0 %v598
        %619 = vmatprep.subr.bf16.mxu0 0
        %620 = vmatpush1.bf16.msra.mxu0 %v599
        %621 = vmatprep.subr.bf16.mxu0 0
        %622 = vmatpush1.bf16.msra.mxu0 %v600
        %623 = vmatprep.subr.bf16.mxu0 0
        %624 = vmatpush1.bf16.msra.mxu0 %v601
        %625 = vmatprep.subr.bf16.mxu0 0
        %626 = vmatpush1.bf16.msra.mxu0 %v602
        %627 = vmatprep.subr.bf16.mxu0 0
        %628 = vmatpush1.bf16.msra.mxu0 0
        %629 = vmatprep.subr.bf16.mxu0 0
        %630 = vmatpush1.bf16.msra.mxu0 0
        %631 = vmatprep.subr.bf16.mxu0 0
        %632 = vmatpush1.bf16.msra.mxu0 0
        %633 = vmatprep.subr.bf16.mxu0 0
        %634 = vmatpush1.bf16.msra.mxu0 0
        %635 = vmatprep.subr.bf16.mxu0 0
        %636 = vmatpush1.bf16.msra.mxu0 0
        %637 = vmatprep.subr.bf16.mxu0 0
        %638 = vmatpush1.bf16.msra.mxu0 0
        %639 = vmatprep.subr.bf16.mxu0 0
        %640 = vmatpush1.bf16.msra.mxu0 0
        %641 = vmatprep.subr.bf16.mxu0 0
        %642 = vmatpush1.bf16.msra.mxu0 0
        %643 = vmatprep.mubr.bf16.mxu0 0
        %644 = vmatmul.mubr.bf16.gmra.mrb[0].mxu0 %v547
        %v645 = vpop.f32.mrb[0].mxu0
        %v646 = vadd.f32 0.0, %v645
        %v647 = vpop.f32.mrb[0].mxu0
        %v648 = vpop.f32.mrb[0].mxu0
        %v649 = vadd.f32 0.0, %v648
        %v650 = vpop.f32.mrb[0].mxu0
        %651 = vmatprep.mubr.bf16.mxu0 0
        %652 = vmatmul.mubr.bf16.gmra.mrb[0].mxu0 %v548
        %v653 = vpop.f32.mrb[0].mxu0
        %v654 = vadd.f32 0.0, %v653
        %v655 = vpop.f32.mrb[0].mxu0
        %v656 = vpop.f32.mrb[0].mxu0
        %v657 = vadd.f32 0.0, %v656
        %v658 = vpop.f32.mrb[0].mxu0
        %659 = vmatprep.mubr.bf16.mxu0 0
        %660 = vmatmul.mubr.bf16.gmra.mrb[0].mxu0 %v549
        %v661 = vpop.f32.mrb[0].mxu0
        %v662 = vadd.f32 0.0, %v661
        %v663 = vpop.f32.mrb[0].mxu0
        %v664 = vpop.f32.mrb[0].mxu0
        %v665 = vadd.f32 0.0, %v664
        %v666 = vpop.f32.mrb[0].mxu0
        %667 = vmatprep.mubr.bf16.mxu0 0
        %668 = vmatmul.mubr.bf16.gmra.mrb[0].mxu0 %v550
        %v669 = vpop.f32.mrb[0].mxu0
        %v670 = vadd.f32 0.0, %v669
        %v671 = vpop.f32.mrb[0].mxu0
        %v672 = vpop.f32.mrb[0].mxu0
        %v673 = vadd.f32 0.0, %v672
        %v674 = vpop.f32.mrb[0].mxu0
        %675 = vmatprep.mubr.bf16.mxu0 0
        %676 = vmatmul.mubr.bf16.gmra.mrb[0].mxu0 %v551
        %v677 = vpop.f32.mrb[0].mxu0
        %v678 = vadd.f32 0.0, %v677
        %v679 = vpop.f32.mrb[0].mxu0
        %v680 = vpop.f32.mrb[0].mxu0
        %v681 = vadd.f32 0.0, %v680
        %v682 = vpop.f32.mrb[0].mxu0
        %683 = vmatprep.mubr.bf16.mxu0 0
        %684 = vmatmul.mubr.bf16.gmra.mrb[0].mxu0 %v552
        %v685 = vpop.f32.mrb[0].mxu0
        %v686 = vadd.f32 0.0, %v685
        %v687 = vpop.f32.mrb[0].mxu0
        %v688 = vpop.f32.mrb[0].mxu0
        %v689 = vadd.f32 0.0, %v688
        %v690 = vpop.f32.mrb[0].mxu0
        %691 = vmatprep.mubr.bf16.mxu0 0
        %692 = vmatmul.mubr.bf16.gmra.mrb[0].mxu0 %v553
        %v693 = vpop.f32.mrb[0].mxu0
        %v694 = vadd.f32 0.0, %v693
        %v695 = vpop.f32.mrb[0].mxu0
        %v696 = vpop.f32.mrb[0].mxu0
        %v697 = vadd.f32 0.0, %v696
        %v698 = vpop.f32.mrb[0].mxu0
        %699 = vmatprep.mubr.bf16.mxu0 0
        %700 = vmatmul.mubr.bf16.gmra.mrb[0].mxu0 %v554
        %v701 = vpop.f32.mrb[0].mxu0
        %v702 = vadd.f32 0.0, %v701
        %v703 = vpop.f32.mrb[0].mxu0
        %v704 = vpop.f32.mrb[0].mxu0
        %v705 = vadd.f32 0.0, %v704
        %v706 = vpop.f32.mrb[0].mxu0
        %707 = vdwg.mxu0
        %v708 = vadd.f32 %v467, %v646
        %v709 = vadd.f32 %v468, %v649
        %v710 = vadd.f32 %v469, %v654
        %v711 = vadd.f32 %v470, %v657
        %v712 = vadd.f32 %v471, %v662
        %v713 = vadd.f32 %v472, %v665
        %v714 = vadd.f32 %v473, %v670
        %v715 = vadd.f32 %v474, %v673
        %v716 = vadd.f32 %v475, %v678
        %v717 = vadd.f32 %v476, %v681
        %v718 = vadd.f32 %v477, %v686
        %v719 = vadd.f32 %v478, %v689
        %v720 = vadd.f32 %v479, %v694
        %v721 = vadd.f32 %v480, %v697
        %v722 = vadd.f32 %v481, %v702
        %v723 = vadd.f32 %v482, %v705
        %724 = vst [vmem:[#allocation2] sm:$0xff] %v708
        %725 = vst [vmem:[#allocation2 + $0x8] sm:$0xff] %v709
        %726 = vst [vmem:[#allocation2 + $0x10] sm:$0xff] %v710
        %727 = vst [vmem:[#allocation2 + $0x18] sm:$0xff] %v711
        %728 = vst [vmem:[#allocation2 + $0x20] sm:$0xff] %v712
        %729 = vst [vmem:[#allocation2 + $0x28] sm:$0xff] %v713
        %730 = vst [vmem:[#allocation2 + $0x30] sm:$0xff] %v714
        %731 = vst [vmem:[#allocation2 + $0x38] sm:$0xff] %v715
        %732 = vst [vmem:[#allocation2 + $0x40] sm:$0xff] %v716
        %733 = vst [vmem:[#allocation2 + $0x48] sm:$0xff] %v717
        %734 = vst [vmem:[#allocation2 + $0x50] sm:$0xff] %v718
        %735 = vst [vmem:[#allocation2 + $0x58] sm:$0xff] %v719
        %736 = vst [vmem:[#allocation2 + $0x60] sm:$0xff] %v720
        %737 = vst [vmem:[#allocation2 + $0x68] sm:$0xff] %v721
        %738 = vst [vmem:[#allocation2 + $0x70] sm:$0xff] %v722
        %739 = vst [vmem:[#allocation2 + $0x78] sm:$0xff] %v723
        %p740 = scmp.eq.s32.totalorder %s26, 2
        // Predicated region
        $region86: #{res_block_forward.3} parent=76 // pred_check
          %p741 = pneg %p740
        $region87: #{res_block_forward.3} parent=76 // pred_check_branch
          %743 = sbr.rel (%p741) target = $region89
        $region88: #{res_block_forward.3} parent=76 // pred_region
          %v744 = vld [vmem:[#allocation2] sm:$0xff]
          %v745 = vld [vmem:[#allocation2 + $0x8] sm:$0xff]
          %v746 = vld [vmem:[#allocation2 + $0x10] sm:$0xff]
          %v747 = vld [vmem:[#allocation2 + $0x18] sm:$0xff]
          %v748 = vld [vmem:[#allocation2 + $0x20] sm:$0xff]
          %v749 = vld [vmem:[#allocation2 + $0x28] sm:$0xff]
          %v750 = vld [vmem:[#allocation2 + $0x30] sm:$0xff]
          %v751 = vld [vmem:[#allocation2 + $0x38] sm:$0xff]
          %v752 = vld [vmem:[#allocation2 + $0x40] sm:$0xff]
          %v753 = vld [vmem:[#allocation2 + $0x48] sm:$0xff]
          %v754 = vld [vmem:[#allocation2 + $0x50] sm:$0xff]
          %v755 = vld [vmem:[#allocation2 + $0x58] sm:$0xff]
          %v756 = vld [vmem:[#allocation2 + $0x60] sm:$0xff]
          %v757 = vld [vmem:[#allocation2 + $0x68] sm:$0xff]
          %v758 = vld [vmem:[#allocation2 + $0x70] sm:$0xff]
          %v759 = vld [vmem:[#allocation2 + $0x78] sm:$0xff]
          %v760 = vld [vmem:[%s432] sm:$0x1]
          %v762 = vlaneseq
          %v763 = vshrl.u32 %v762, 7
          %v764 = vsub.s32 0, %v763
          %v765 = vrot.slane %v760, %v764
          %v767 = vmul.f32 %v744, %v765
          %v768 = vmul.f32 %v745, %v765
          %v769 = vmul.f32 %v746, %v765
          %v770 = vmul.f32 %v747, %v765
          %v771 = vmul.f32 %v748, %v765
          %v772 = vmul.f32 %v749, %v765
          %v773 = vmul.f32 %v750, %v765
          %v774 = vmul.f32 %v751, %v765
          %v775 = vmul.f32 %v752, %v765
          %v776 = vmul.f32 %v753, %v765
          %v777 = vmul.f32 %v754, %v765
          %v778 = vmul.f32 %v755, %v765
          %v779 = vmul.f32 %v756, %v765
          %v780 = vmul.f32 %v757, %v765
          %v781 = vmul.f32 %v758, %v765
          %v782 = vmul.f32 %v759, %v765
          %v783 = vld [vmem:[%s435] sm:$0x1]
          %v785 = vlaneseq
          %v786 = vshrl.u32 %v785, 7
          %v787 = vsub.s32 0, %v786
          %v788 = vrot.slane %v783, %v787
          %v790 = vadd.f32 %v767, %v788
          %v791 = vadd.f32 %v768, %v788
          %v792 = vadd.f32 %v769, %v788
          %v793 = vadd.f32 %v770, %v788
          %v794 = vadd.f32 %v771, %v788
          %v795 = vadd.f32 %v772, %v788
          %v796 = vadd.f32 %v773, %v788
          %v797 = vadd.f32 %v774, %v788
          %v798 = vadd.f32 %v775, %v788
          %v799 = vadd.f32 %v776, %v788
          %v800 = vadd.f32 %v777, %v788
          %v801 = vadd.f32 %v778, %v788
          %v802 = vadd.f32 %v779, %v788
          %v803 = vadd.f32 %v780, %v788
          %v804 = vadd.f32 %v781, %v788
          %v805 = vadd.f32 %v782, %v788
          %v806 = vld [vmem:[%s443] sm:$0xff]
          %v807 = vld [vmem:[%s443 + $0x8] sm:$0xff]
          %v808 = vld [vmem:[%s443 + $0x10] sm:$0xff]
          %v809 = vld [vmem:[%s443 + $0x18] sm:$0xff]
          %v810 = vld [vmem:[%s443 + $0x20] sm:$0xff]
          %v811 = vld [vmem:[%s443 + $0x28] sm:$0xff]
          %v812 = vld [vmem:[%s443 + $0x30] sm:$0xff]
          %v813 = vld [vmem:[%s443 + $0x38] sm:$0xff]
          %v814 = vld [vmem:[%s443 + $0x40] sm:$0xff]
          %v815 = vld [vmem:[%s443 + $0x48] sm:$0xff]
          %v816 = vld [vmem:[%s443 + $0x50] sm:$0xff]
          %v817 = vld [vmem:[%s443 + $0x58] sm:$0xff]
          %v818 = vld [vmem:[%s443 + $0x60] sm:$0xff]
          %v819 = vld [vmem:[%s443 + $0x68] sm:$0xff]
          %v820 = vld [vmem:[%s443 + $0x70] sm:$0xff]
          %v821 = vld [vmem:[%s443 + $0x78] sm:$0xff]
          %v822 = vadd.f32 %v790, %v806
          %v823 = vadd.f32 %v791, %v807
          %v824 = vadd.f32 %v792, %v808
          %v825 = vadd.f32 %v793, %v809
          %v826 = vadd.f32 %v794, %v810
          %v827 = vadd.f32 %v795, %v811
          %v828 = vadd.f32 %v796, %v812
          %v829 = vadd.f32 %v797, %v813
          %v830 = vadd.f32 %v798, %v814
          %v831 = vadd.f32 %v799, %v815
          %v832 = vadd.f32 %v800, %v816
          %v833 = vadd.f32 %v801, %v817
          %v834 = vadd.f32 %v802, %v818
          %v835 = vadd.f32 %v803, %v819
          %v836 = vadd.f32 %v804, %v820
          %v837 = vadd.f32 %v805, %v821
          %v838 = vmax.f32 %v822, 0.0
          %v839 = vmax.f32 %v823, 0.0
          %v840 = vmax.f32 %v824, 0.0
          %v841 = vmax.f32 %v825, 0.0
          %v842 = vmax.f32 %v826, 0.0
          %v843 = vmax.f32 %v827, 0.0
          %v844 = vmax.f32 %v828, 0.0
          %v845 = vmax.f32 %v829, 0.0
          %v846 = vmax.f32 %v830, 0.0
          %v847 = vmax.f32 %v831, 0.0
          %v848 = vmax.f32 %v832, 0.0
          %v849 = vmax.f32 %v833, 0.0
          %v850 = vmax.f32 %v834, 0.0
          %v851 = vmax.f32 %v835, 0.0
          %v852 = vmax.f32 %v836, 0.0
          %v853 = vmax.f32 %v837, 0.0
          %854 = vst [vmem:[%s419] sm:$0xff] %v838
          %855 = vst [vmem:[%s419 + $0x8] sm:$0xff] %v839
          %856 = vst [vmem:[%s419 + $0x10] sm:$0xff] %v840
          %857 = vst [vmem:[%s419 + $0x18] sm:$0xff] %v841
          %858 = vst [vmem:[%s419 + $0x20] sm:$0xff] %v842
          %859 = vst [vmem:[%s419 + $0x28] sm:$0xff] %v843
          %860 = vst [vmem:[%s419 + $0x30] sm:$0xff] %v844
          %861 = vst [vmem:[%s419 + $0x38] sm:$0xff] %v845
          %862 = vst [vmem:[%s419 + $0x40] sm:$0xff] %v846
          %863 = vst [vmem:[%s419 + $0x48] sm:$0xff] %v847
          %864 = vst [vmem:[%s419 + $0x50] sm:$0xff] %v848
          %865 = vst [vmem:[%s419 + $0x58] sm:$0xff] %v849
          %866 = vst [vmem:[%s419 + $0x60] sm:$0xff] %v850
          %867 = vst [vmem:[%s419 + $0x68] sm:$0xff] %v851
          %868 = vst [vmem:[%s419 + $0x70] sm:$0xff] %v852
          %869 = vst [vmem:[%s419 + $0x78] sm:$0xff] %v853
        $region89: #{res_block_forward.3} parent=76 // pred_fallthru
          _
        %s870 = sand.u32 %s184, 1
        %s871 = scalar_lea.sflag [#allocation5], %s870
        %s872 = sand.u32 %s184, 1
        %s873 = smul.addr %s872, 128
        %s874 = scalar_lea.vmem [#allocation4], %s873
        // Predicated region
        $region90: #{res_block_forward.3} parent=76 // pred_check
          %p875 = pneg %p194
        $region91: #{res_block_forward.3} parent=76 // pred_check_branch
          %877 = sbr.rel (%p875) target = $region93
        $region92: #{res_block_forward.3} parent=76 // pred_region
          %s878 = smul.u32 16, %s24
          %s880 = ssub.s32 2048, 2048
          %881 = vsyncadd %s871, %s880
          %s882 = sadd.s32 %s25, %s878
          %s883 = smul.addr %s882, 128
          %s884 = scalar_lea.hbm %s5, %s883
          %s885 = sshll.u32 %s874, 4
          %s886 = int_to_ptr.vmem [resolvable:$true] %s885
          %891 = dma.vmem_to_hbm [thread:$0]  %s886, 2048, %s884, %s871, 128, 128, 8
        $region93: #{res_block_forward.3} parent=76 // pred_fallthru
          _
      $region77: #{res_block_forward.3} parent=5 // pred_fallthru
        _
      %p892 = scmp.le.s32.totalorder 2, %s14
      // Predicated region
      $region94: #{res_block_forward.3} parent=5 // pred_check
        %p893 = pneg %p892
      $region95: #{res_block_forward.3} parent=5 // pred_check_branch
        %895 = sbr.rel (%p893) target = $region97
      $region96: #{res_block_forward.3} parent=5 // pred_region
        %s896 = ssub.s32 %s14, 2
        // Predicated region
        $region98: #{res_block_forward.3} parent=96 // pred_check
          %p897 = pneg %p200
        $region99: #{res_block_forward.3} parent=96 // pred_check_branch
          %899 = sbr.rel (%p897) target = $region101
        $region100: #{res_block_forward.3} parent=96 // pred_region
          %s900 = sand.u32 %s185, 1
          %s901 = scalar_lea.sflag [#allocation5], %s900
          %s902 = sand.u32 %s185, 1
          %s903 = smul.addr %s902, 128
          %s904 = scalar_lea.vmem [#allocation4], %s903
          %905 = dma.done %s901, 2048
        $region101: #{res_block_forward.3} parent=96 // pred_fallthru
          _
      $region97: #{res_block_forward.3} parent=5 // pred_fallthru
        _
    $region6: #{res_block_forward.3} parent=1 // loop_footer
      %s18 = sadd.s32 1, %s14
    $region7: #{res_block_forward.3} parent=1 // loop_footer_branch
      %13 = sbr.rel target = $region3
    $region8: #{res_block_forward.3} parent=1 // loop_exit
      _
    %906 = vsyncpa [#allocation5], 1
    %s907 = scalar_lea.sflag [#allocation5], 1
    %908 = vsyncpa %s907, 1

</llo_original>
